<compile_context>
chip_gen: v7x
topology: tpu7x:2x2x1
jax: 0.10.0
libtpu: 0.0.40
codegen_flags: <defaults>
</compile_context>

<pallas_src>
import functools

import jax
import jax.numpy as jnp
import numpy as np
from jax.experimental import pallas as pl
from jax.experimental.pallas import tpu as pltpu


def _sigmoid(z):
    # Plain exp + divide (EUP + VPU); avoids relying on a lax.logistic lowering.
    return 1.0 / (1.0 + jnp.exp(-z))


def _ca_block_kernel(x_ref, pool_ref, th_ref, tw_ref, w1_ref, wh_ref, ww_ref, o_ref,
                     *, H, W, B, C, mid):
    HW = H * W
    BC = B * C

    x2d = x_ref[...]                                      # (B*C, HW), input dtype (no f32 copy)

    # ---- coordinate pooling: ONE batched MXU matmul against the 0/1 pooling matrix ----
    # first H columns = sum over W (-> x_h), last W columns = sum over H (-> x_w)
    pooled = jnp.dot(x2d, pool_ref[...], preferred_element_type=jnp.float32)   # (B*C, H+W) f32

    # sums -> means; per-column scale is built in-kernel (iota + where, scalar literals only),
    # so no array constants are captured by the kernel.
    col = jax.lax.broadcasted_iota(jnp.int32, (1, H + W), 1)
    scale = jnp.where(col < H, 1.0 / W, 1.0 / H)          # (1, H+W) f32
    cat = (pooled * scale).reshape(B, C, H + W)           # == torch.cat((x_h, x_w), dim=-1)

    # ---- relu(conv_1x1(cat)) fused, then split at H (== wide); batched over B ----
    w1 = jnp.broadcast_to(w1_ref[...].astype(jnp.float32)[None], (B, mid, C))
    wh = jnp.broadcast_to(wh_ref[...].astype(jnp.float32)[None], (B, C, mid))
    ww = jnp.broadcast_to(ww_ref[...].astype(jnp.float32)[None], (B, C, mid))

    y = jnp.einsum("bmc,bcx->bmx", w1, cat, preferred_element_type=jnp.float32)  # (B, mid, H+W)
    y = jnp.maximum(y, 0.0)
    s_h = _sigmoid(jnp.einsum("bcm,bmh->bch", wh, y[:, :, :H],
                              preferred_element_type=jnp.float32))               # (B, C, H) f32
    s_w = _sigmoid(jnp.einsum("bcm,bmw->bcw", ww, y[:, :, H:],
                              preferred_element_type=jnp.float32))               # (B, C, W) f32

    # ---- expand gates back to the lane-dense (B*C, HW) layout via exact 0/1 matmuls ----
    # Gate stays f32 through the s_h*s_w product (tighter parity with the torch forward),
    # then is cast ONCE so the big multiply + store is a single pass in the input dtype.
    gate = (jnp.dot(s_h.reshape(BC, H), th_ref[...], preferred_element_type=jnp.float32) *
            jnp.dot(s_w.reshape(BC, W), tw_ref[...], preferred_element_type=jnp.float32))
    o_ref[...] = (x2d * gate.astype(x2d.dtype)).astype(o_ref.dtype)


def _tpu_defaults():
    """(block_bytes_target, vmem_cap_bytes) per TPU generation."""
    kind = ""
    try:
        kind = jax.devices()[0].device_kind.lower()
    except Exception:
        pass
    if "v7" in kind or "7x" in kind:
        return 7 * 1024 * 1024, 52 * 1024 * 1024          # 64 MiB physical VMEM, fast HBM
    if "v5" in kind or "v6" in kind:
        return 14 * 1024 * 1024, 100 * 1024 * 1024        # 128 MiB physical VMEM
    return 6 * 1024 * 1024, 48 * 1024 * 1024              # unknown backend / interpret: conservative


def ca_block(x, w1, wh, ww, *, block_bytes_target=None, vmem_cap_bytes=None):
    """Pallas TPU implementation of CA_Block.forward (self.bn is unused in the torch forward)."""
    N, C, H, W = x.shape
    assert H == W, "CA_Block forward semantics (split/expand_as) require H == W"
    if C % 8 != 0:
        # TODO(synk): support C % 8 != 0 (pad channels or use a full-array block).
        raise NotImplementedError("this kernel assumes C is a multiple of 8")
    HW = H * W
    mid = w1.shape[0]
    dt = x.dtype
    itemsize = x.dtype.itemsize

    tgt_default, cap_default = _tpu_defaults()
    block_bytes_target = tgt_default if block_bytes_target is None else block_bytes_target
    vmem_cap_bytes = cap_default if vmem_cap_bytes is None else vmem_cap_bytes

    # --- host-built constant operands (0/1 selection matrices; exact in any dtype) ---
    eye_h = np.eye(H, dtype=np.float32)
    eye_w = np.eye(W, dtype=np.float32)
    t_h_np = np.repeat(eye_h, W, axis=1)                  # (H, HW): t_h[h, h*W + w] = 1
    t_w_np = np.tile(eye_w, (1, H))                       # (W, HW): t_w[w, h*W + w] = 1
    pool_np = np.concatenate([t_h_np, t_w_np], axis=0).T  # (HW, H + W)
    pool = jnp.asarray(pool_np, dtype=dt)                 # x dtype: big matmul stays in input dtype
    t_h = jnp.asarray(t_h_np, dtype=jnp.float32)          # f32: gates stay f32 up to one final cast
    t_w = jnp.asarray(t_w_np, dtype=jnp.float32)

    const_bytes = pool_np.size * itemsize + (t_h_np.size + t_w_np.size) * 4
    weight_bytes = int(w1.size + wh.size + ww.size) * 4
    if const_bytes > 16 * 1024 * 1024:
        # TODO(synk): large-H/W fallback (C-tiled two-phase pass / reduction-based pooling).
        raise NotImplementedError("CA_Block Pallas kernel targets small feature maps; "
                                  f"selection matrices would need {const_bytes} bytes of VMEM")

    # --- block sizing: as many images per grid step as target/VMEM allow, while keeping
    #     >= 2 grid steps (v7x megacore + DMA/compute overlap) ---
    img_bytes = C * HW * itemsize
    B = max(1, min(N, int(block_bytes_target) // img_bytes))
    min_steps = 2 if N >= 2 else 1
    if N >= 4 and N * img_bytes >= 8 * 1024 * 1024:
        min_steps = 4
    B = min(B, max(1, N // min_steps))

    def vmem_needed(b):
        io = 4 * b * img_bytes                 # x + out blocks, double-buffered
        interm = 3 * b * C * HW * 4            # f32 gate-expansion temporaries inside the kernel
        return io + interm + 2 * const_bytes + 2 * weight_bytes + 4 * 1024 * 1024

    while B > 1 and vmem_needed(B) > vmem_cap_bytes:
        B -= 1
    vmem_limit = int(min(vmem_cap_bytes,
                         max(vmem_needed(B) + 8 * 1024 * 1024, 32 * 1024 * 1024)))

    num_steps = pl.cdiv(N, B)                  # non-divisor B: padded tail reads, masked writes
    x2d = x.reshape(N * C, HW)                 # lane-dense layout; free metadata reshape

    kernel = functools.partial(_ca_block_kernel, H=H, W=W, B=B, C=C, mid=mid)

    def _const_spec(shape, single_buffer):
        # Grid-invariant operands: single-buffer them (reclaims VMEM, esp. on v7x) if supported.
        if single_buffer and hasattr(pl, "Buffered"):
            return pl.BlockSpec(shape, lambda *_: (0,) * len(shape),
                                pipeline_mode=pl.Buffered(1))
        return pl.BlockSpec(shape, lambda *_: (0,) * len(shape))

    def _run(single_buffer_consts):
        return pl.pallas_call(
            kernel,
            out_shape=jax.ShapeDtypeStruct((N * C, HW), dt),
            grid_spec=pltpu.PrefetchScalarGridSpec(
                num_scalar_prefetch=0,
                grid=(num_steps,),
                in_specs=[
                    pl.BlockSpec((B * C, HW), lambda i: (i, 0)),       # x: B images / step
                    _const_spec((HW, H + W), single_buffer_consts),    # pooling matrix (resident)
                    _const_spec((H, HW), single_buffer_consts),        # s_h expansion (resident)
                    _const_spec((W, HW), single_buffer_consts),        # s_w expansion (resident)
                    _const_spec((mid, C), single_buffer_consts),       # conv_1x1 weight
                    _const_spec((C, mid), single_buffer_consts),       # F_h weight
                    _const_spec((C, mid), single_buffer_consts),       # F_w weight
                ],
                out_specs=pl.BlockSpec((B * C, HW), lambda i: (i, 0)),
            ),
            compiler_params=pltpu.CompilerParams(
                dimension_semantics=("parallel",),
                vmem_limit_bytes=vmem_limit,
            ),
        )(x2d, pool, t_h, t_w, w1, wh, ww)

    try:
        out2d = _run(True)
    except Exception:
        # pipeline_mode=pl.Buffered(1) unavailable on this jax version/backend: fall back to
        # default double-buffered constants (correctness unaffected).
        out2d = _run(False)

    return out2d.reshape(N, C, H, W)


def ca_block_ref(x, w1, wh, ww):
    """Pure-JAX reference reproducing the PyTorch forward."""
    hi = jax.lax.Precision.HIGHEST
    xf = x.astype(jnp.float32)
    pool_w = jnp.mean(xf, axis=3)                    # (N, C, H)  == x_h
    pool_h = jnp.mean(xf, axis=2)                    # (N, C, W)  == x_w
    yh = jax.nn.relu(jnp.einsum("mc,nch->nmh", w1, pool_w, precision=hi))
    yw = jax.nn.relu(jnp.einsum("mc,ncw->nmw", w1, pool_h, precision=hi))
    s_h = jax.nn.sigmoid(jnp.einsum("cm,nmh->nch", wh, yh, precision=hi))
    s_w = jax.nn.sigmoid(jnp.einsum("cm,nmw->ncw", ww, yw, precision=hi))
    return (xf * s_h[:, :, :, None] * s_w[:, :, None, :]).astype(x.dtype)


if __name__ == "__main__":
    # Small shapes consistent with the module: channels divisible by reduction=16.
    N, C, H, W = 2, 32, 16, 16
    reduction = 16
    mid = C // reduction

    key = jax.random.PRNGKey(0)
    kx, k1, kh, kw, kx2 = jax.random.split(key, 5)
    x = jax.random.normal(kx, (N, C, H, W), dtype=jnp.float32)
    # Deterministic synthetic weights (1x1 convs, no bias) with kaiming-ish scale.
    w1 = jax.random.normal(k1, (mid, C), dtype=jnp.float32) * (1.0 / np.sqrt(C))
    wh = jax.random.normal(kh, (C, mid), dtype=jnp.float32) * (1.0 / np.sqrt(mid))
    ww = jax.random.normal(kw, (C, mid), dtype=jnp.float32) * (1.0 / np.sqrt(mid))

    # 1) f32 path, even batch (two grid steps -> megacore-friendly).  Tolerance allows for
    #    in-kernel MXU f32 matmul pass behavior differing across TPU generations.
    out = jax.block_until_ready(ca_block(x, w1, wh, ww))
    ref = ca_block_ref(x, w1, wh, ww)
    np.testing.assert_allclose(np.asarray(out), np.asarray(ref), rtol=5e-3, atol=5e-3)

    # 2) odd batch: exercises the cdiv grid with a padded tail block.
    x5 = jax.random.normal(kx2, (5, C, H, W), dtype=jnp.float32)
    out5 = jax.block_until_ready(ca_block(x5, w1, wh, ww))
    ref5 = ca_block_ref(x5, w1, wh, ww)
    np.testing.assert_allclose(np.asarray(out5), np.asarray(ref5), rtol=5e-3, atol=5e-3)

    # 3) bf16 I/O path (halves HBM traffic; gates computed in f32, applied in bf16).
    x_bf = x.astype(jnp.bfloat16)
    out_bf = jax.block_until_ready(ca_block(x_bf, w1, wh, ww))
    ref_bf = ca_block_ref(x_bf, w1, wh, ww)
    np.testing.assert_allclose(np.asarray(out_bf).astype(np.float32),
                               np.asarray(ref_bf).astype(np.float32),
                               rtol=3e-2, atol=3e-2)

    print("KERNEL_OK")
</pallas_src>

<mosaic_0001>
module attributes {stable_mosaic.version = 11 : i64} {
  func.func @_ca_block_kernel(%arg0: i32, %arg1: memref<32x256xf32, #tpu.memory_space<vmem>>, %arg2: memref<256x32xf32, #tpu.memory_space<vmem>>, %arg3: memref<16x256xf32, #tpu.memory_space<vmem>>, %arg4: memref<16x256xf32, #tpu.memory_space<vmem>>, %arg5: memref<2x32xf32, #tpu.memory_space<vmem>>, %arg6: memref<32x2xf32, #tpu.memory_space<vmem>>, %arg7: memref<32x2xf32, #tpu.memory_space<vmem>>, %arg8: memref<32x256xf32, #tpu.memory_space<vmem>>) attributes {dimension_semantics = [#tpu.dimension_semantics<parallel>], iteration_bounds = array<i64: 2>, scalar_prefetch = 0 : i64, scratch_operands = 0 : i64, tpu.core_type = #tpu.core_type<tc>, window_params = [{transform_indices = @transform_0, window_bounds = array<i64: 32, 256>}, {pipeline_mode = #tpu.pipeline_mode<synchronous>, transform_indices = @transform_1, window_bounds = array<i64: 256, 32>}, {pipeline_mode = #tpu.pipeline_mode<synchronous>, transform_indices = @transform_2, window_bounds = array<i64: 16, 256>}, {pipeline_mode = #tpu.pipeline_mode<synchronous>, transform_indices = @transform_3, window_bounds = array<i64: 16, 256>}, {pipeline_mode = #tpu.pipeline_mode<synchronous>, transform_indices = @transform_4, window_bounds = array<i64: 2, 32>}, {pipeline_mode = #tpu.pipeline_mode<synchronous>, transform_indices = @transform_5, window_bounds = array<i64: 32, 2>}, {pipeline_mode = #tpu.pipeline_mode<synchronous>, transform_indices = @transform_6, window_bounds = array<i64: 32, 2>}, {transform_indices = @transform_7, window_bounds = array<i64: 32, 256>}]} {
    %c0 = arith.constant 0 : index
    %c0_0 = arith.constant 0 : index
    %0 = vector.load %arg1[%c0, %c0_0] : memref<32x256xf32, #tpu.memory_space<vmem>>, vector<32x256xf32>
    %c0_1 = arith.constant 0 : index
    %c0_2 = arith.constant 0 : index
    %1 = vector.load %arg2[%c0_1, %c0_2] : memref<256x32xf32, #tpu.memory_space<vmem>>, vector<256x32xf32>
    %cst = arith.constant dense<0.000000e+00> : vector<32x32xf32>
    %2 = tpu.matmul %0, %1, %cst {dimension_numbers = #tpu.dot_dimension_numbers<[1], [0], [0], [1], [0, 0, 1, 1], [], []>} : vector<32x256xf32>, vector<256x32xf32>, vector<32x32xf32> -> vector<32x32xf32>
    %3 = tpu.iota {dimensions = array<i32: 1>} : vector<1x32xi32>
    %c16_i32 = arith.constant 16 : i32
    %4 = vector.broadcast %c16_i32 : i32 to vector<1x32xi32>
    %5 = arith.cmpi slt, %3, %4 : vector<1x32xi32>
    %cst_3 = arith.constant 6.250000e-02 : f32
    %cst_4 = arith.constant 6.250000e-02 : f32
    %6 = vector.broadcast %cst_3 : f32 to vector<1x32xf32>
    %7 = vector.broadcast %cst_4 : f32 to vector<1x32xf32>
    %8 = arith.select %5, %6, %7 : vector<1x32xi1>, vector<1x32xf32>
    %9 = vector.broadcast %8 : vector<1x32xf32> to vector<32x32xf32>
    %10 = arith.mulf %2, %9 : vector<32x32xf32>
    %11 = vector.shape_cast %10 : vector<32x32xf32> to vector<1x32x32xf32>
    %c0_5 = arith.constant 0 : index
    %c0_6 = arith.constant 0 : index
    %12 = vector.load %arg5[%c0_5, %c0_6] : memref<2x32xf32, #tpu.memory_space<vmem>>, vector<2x32xf32>
    %13 = vector.shape_cast %12 : vector<2x32xf32> to vector<1x2x32xf32>
    %c0_7 = arith.constant 0 : index
    %c0_8 = arith.constant 0 : index
    %14 = vector.load %arg6[%c0_7, %c0_8] : memref<32x2xf32, #tpu.memory_space<vmem>>, vector<32x2xf32>
    %15 = vector.shape_cast %14 : vector<32x2xf32> to vector<1x32x2xf32>
    %c0_9 = arith.constant 0 : index
    %c0_10 = arith.constant 0 : index
    %16 = vector.load %arg7[%c0_9, %c0_10] : memref<32x2xf32, #tpu.memory_space<vmem>>, vector<32x2xf32>
    %17 = vector.shape_cast %16 : vector<32x2xf32> to vector<1x32x2xf32>
    "tpu.trace_start"() <{level = 10 : i32, message = "bmc,bcx->bmx"}> : () -> ()
    %cst_11 = arith.constant dense<0.000000e+00> : vector<1x2x32xf32>
    %18 = tpu.matmul %13, %11, %cst_11 {dimension_numbers = #tpu.dot_dimension_numbers<[2], [1], [1], [2], [0, 0, 0, 1, 1, 2], [0], [0]>} : vector<1x2x32xf32>, vector<1x32x32xf32>, vector<1x2x32xf32> -> vector<1x2x32xf32>
    "tpu.trace_stop"() : () -> ()
    %cst_12 = arith.constant 0.000000e+00 : f32
    %19 = vector.broadcast %cst_12 : f32 to vector<1x2x32xf32>
    %20 = arith.maximumf %18, %19 : vector<1x2x32xf32>
    %21 = vector.extract_strided_slice %20 {offsets = [0, 0, 0], sizes = [1, 2, 16], strides = [1, 1, 1]} : vector<1x2x32xf32> to vector<1x2x16xf32>
    "tpu.trace_start"() <{level = 10 : i32, message = "bcm,bmh->bch"}> : () -> ()
    %cst_13 = arith.constant dense<0.000000e+00> : vector<1x32x16xf32>
    %22 = tpu.matmul %15, %21, %cst_13 {dimension_numbers = #tpu.dot_dimension_numbers<[2], [1], [1], [2], [0, 0, 0, 1, 1, 2], [0], [0]>} : vector<1x32x2xf32>, vector<1x2x16xf32>, vector<1x32x16xf32> -> vector<1x32x16xf32>
    "tpu.trace_stop"() : () -> ()
    %cst_14 = arith.constant 0.000000e+00 : f32
    %23 = vector.broadcast %cst_14 : f32 to vector<1x32x16xf32>
    %24 = arith.subf %23, %22 : vector<1x32x16xf32>
    %25 = math.exp %24 : vector<1x32x16xf32>
    %cst_15 = arith.constant 1.000000e+00 : f32
    %26 = vector.broadcast %cst_15 : f32 to vector<1x32x16xf32>
    %27 = arith.addf %26, %25 : vector<1x32x16xf32>
    %cst_16 = arith.constant 1.000000e+00 : f32
    %28 = vector.broadcast %cst_16 : f32 to vector<1x32x16xf32>
    %29 = arith.divf %28, %27 : vector<1x32x16xf32>
    %30 = vector.extract_strided_slice %20 {offsets = [0, 0, 16], sizes = [1, 2, 16], strides = [1, 1, 1]} : vector<1x2x32xf32> to vector<1x2x16xf32>
    "tpu.trace_start"() <{level = 10 : i32, message = "bcm,bmw->bcw"}> : () -> ()
    %cst_17 = arith.constant dense<0.000000e+00> : vector<1x32x16xf32>
    %31 = tpu.matmul %17, %30, %cst_17 {dimension_numbers = #tpu.dot_dimension_numbers<[2], [1], [1], [2], [0, 0, 0, 1, 1, 2], [0], [0]>} : vector<1x32x2xf32>, vector<1x2x16xf32>, vector<1x32x16xf32> -> vector<1x32x16xf32>
    "tpu.trace_stop"() : () -> ()
    %cst_18 = arith.constant 0.000000e+00 : f32
    %32 = vector.broadcast %cst_18 : f32 to vector<1x32x16xf32>
    %33 = arith.subf %32, %31 : vector<1x32x16xf32>
    %34 = math.exp %33 : vector<1x32x16xf32>
    %cst_19 = arith.constant 1.000000e+00 : f32
    %35 = vector.broadcast %cst_19 : f32 to vector<1x32x16xf32>
    %36 = arith.addf %35, %34 : vector<1x32x16xf32>
    %cst_20 = arith.constant 1.000000e+00 : f32
    %37 = vector.broadcast %cst_20 : f32 to vector<1x32x16xf32>
    %38 = arith.divf %37, %36 : vector<1x32x16xf32>
    %39 = vector.shape_cast %29 : vector<1x32x16xf32> to vector<32x16xf32>
    %c0_21 = arith.constant 0 : index
    %c0_22 = arith.constant 0 : index
    %40 = vector.load %arg3[%c0_21, %c0_22] : memref<16x256xf32, #tpu.memory_space<vmem>>, vector<16x256xf32>
    %cst_23 = arith.constant dense<0.000000e+00> : vector<32x256xf32>
    %41 = tpu.matmul %39, %40, %cst_23 {dimension_numbers = #tpu.dot_dimension_numbers<[1], [0], [0], [1], [0, 0, 1, 1], [], []>} : vector<32x16xf32>, vector<16x256xf32>, vector<32x256xf32> -> vector<32x256xf32>
    %42 = vector.shape_cast %38 : vector<1x32x16xf32> to vector<32x16xf32>
    %c0_24 = arith.constant 0 : index
    %c0_25 = arith.constant 0 : index
    %43 = vector.load %arg4[%c0_24, %c0_25] : memref<16x256xf32, #tpu.memory_space<vmem>>, vector<16x256xf32>
    %cst_26 = arith.constant dense<0.000000e+00> : vector<32x256xf32>
    %44 = tpu.matmul %42, %43, %cst_26 {dimension_numbers = #tpu.dot_dimension_numbers<[1], [0], [0], [1], [0, 0, 1, 1], [], []>} : vector<32x16xf32>, vector<16x256xf32>, vector<32x256xf32> -> vector<32x256xf32>
    %45 = arith.mulf %41, %44 : vector<32x256xf32>
    %46 = arith.mulf %0, %45 : vector<32x256xf32>
    %c0_27 = arith.constant 0 : index
    %c0_28 = arith.constant 0 : index
    %47 = vector.load %arg8[%c0_27, %c0_28] : memref<32x256xf32, #tpu.memory_space<vmem>>, vector<32x256xf32>
    tpu.vector_store %arg8[%c0_27, %c0_28], %46 {strides = array<i32>} : memref<32x256xf32, #tpu.memory_space<vmem>>, vector<32x256xf32>,
    return
  }
  func.func @transform_0(%arg0: i32) -> (i32, i32) {
    %c0_i32 = arith.constant 0 : i32
    %c0_i32_0 = arith.constant 0 : i32
    return %arg0, %c0_i32 : i32, i32
  }
  func.func @transform_1(%arg0: i32) -> (i32, i32) {
    %c0_i32 = arith.constant 0 : i32
    %c0_i32_0 = arith.constant 0 : i32
    %c0_i32_1 = arith.constant 0 : i32
    return %c0_i32, %c0_i32_0 : i32, i32
  }
  func.func @transform_2(%arg0: i32) -> (i32, i32) {
    %c0_i32 = arith.constant 0 : i32
    %c0_i32_0 = arith.constant 0 : i32
    %c0_i32_1 = arith.constant 0 : i32
    return %c0_i32, %c0_i32_0 : i32, i32
  }
  func.func @transform_3(%arg0: i32) -> (i32, i32) {
    %c0_i32 = arith.constant 0 : i32
    %c0_i32_0 = arith.constant 0 : i32
    %c0_i32_1 = arith.constant 0 : i32
    return %c0_i32, %c0_i32_0 : i32, i32
  }
  func.func @transform_4(%arg0: i32) -> (i32, i32) {
    %c0_i32 = arith.constant 0 : i32
    %c0_i32_0 = arith.constant 0 : i32
    %c0_i32_1 = arith.constant 0 : i32
    return %c0_i32, %c0_i32_0 : i32, i32
  }
  func.func @transform_5(%arg0: i32) -> (i32, i32) {
    %c0_i32 = arith.constant 0 : i32
    %c0_i32_0 = arith.constant 0 : i32
    %c0_i32_1 = arith.constant 0 : i32
    return %c0_i32, %c0_i32_0 : i32, i32
  }
  func.func @transform_6(%arg0: i32) -> (i32, i32) {
    %c0_i32 = arith.constant 0 : i32
    %c0_i32_0 = arith.constant 0 : i32
    %c0_i32_1 = arith.constant 0 : i32
    return %c0_i32, %c0_i32_0 : i32, i32
  }
  func.func @transform_7(%arg0: i32) -> (i32, i32) {
    %c0_i32 = arith.constant 0 : i32
    %c0_i32_0 = arith.constant 0 : i32
    return %arg0, %c0_i32 : i32, i32
  }
}

module attributes {stable_mosaic.version = 11 : i64} {
  func.func @_ca_block_kernel(%arg0: i32, %arg1: memref<32x256xf32, #tpu.memory_space<vmem>>, %arg2: memref<256x32xf32, #tpu.memory_space<vmem>>, %arg3: memref<16x256xf32, #tpu.memory_space<vmem>>, %arg4: memref<16x256xf32, #tpu.memory_space<vmem>>, %arg5: memref<2x32xf32, #tpu.memory_space<vmem>>, %arg6: memref<32x2xf32, #tpu.memory_space<vmem>>, %arg7: memref<32x2xf32, #tpu.memory_space<vmem>>, %arg8: memref<32x256xf32, #tpu.memory_space<vmem>>) attributes {dimension_semantics = [#tpu.dimension_semantics<parallel>], iteration_bounds = array<i64: 2>, scalar_prefetch = 0 : i64, scratch_operands = 0 : i64, tpu.core_type = #tpu.core_type<tc>, window_params = [{transform_indices = @transform_0, window_bounds = array<i64: 32, 256>}, {pipeline_mode = #tpu.pipeline_mode<synchronous>, transform_indices = @transform_1, window_bounds = array<i64: 256, 32>}, {pipeline_mode = #tpu.pipeline_mode<synchronous>, transform_indices = @transform_2, window_bounds = array<i64: 16, 256>}, {pipeline_mode = #tpu.pipeline_mode<synchronous>, transform_indices = @transform_3, window_bounds = array<i64: 16, 256>}, {pipeline_mode = #tpu.pipeline_mode<synchronous>, transform_indices = @transform_4, window_bounds = array<i64: 2, 32>}, {pipeline_mode = #tpu.pipeline_mode<synchronous>, transform_indices = @transform_5, window_bounds = array<i64: 32, 2>}, {pipeline_mode = #tpu.pipeline_mode<synchronous>, transform_indices = @transform_6, window_bounds = array<i64: 32, 2>}, {transform_indices = @transform_7, window_bounds = array<i64: 32, 256>}]} {
    %c0 = arith.constant 0 : index
    %c0_0 = arith.constant 0 : index
    %0 = vector.load %arg1[%c0, %c0_0] : memref<32x256xf32, #tpu.memory_space<vmem>>, vector<32x256xf32>
    %c0_1 = arith.constant 0 : index
    %c0_2 = arith.constant 0 : index
    %1 = vector.load %arg2[%c0_1, %c0_2] : memref<256x32xf32, #tpu.memory_space<vmem>>, vector<256x32xf32>
    %cst = arith.constant dense<0.000000e+00> : vector<32x32xf32>
    %2 = tpu.matmul %0, %1, %cst {dimension_numbers = #tpu.dot_dimension_numbers<[1], [0], [0], [1], [0, 0, 1, 1], [], []>} : vector<32x256xf32>, vector<256x32xf32>, vector<32x32xf32> -> vector<32x32xf32>
    %3 = tpu.iota {dimensions = array<i32: 1>} : vector<1x32xi32>
    %c16_i32 = arith.constant 16 : i32
    %4 = vector.broadcast %c16_i32 : i32 to vector<1x32xi32>
    %5 = arith.cmpi slt, %3, %4 : vector<1x32xi32>
    %cst_3 = arith.constant 6.250000e-02 : f32
    %cst_4 = arith.constant 6.250000e-02 : f32
    %6 = vector.broadcast %cst_3 : f32 to vector<1x32xf32>
    %7 = vector.broadcast %cst_4 : f32 to vector<1x32xf32>
    %8 = arith.select %5, %6, %7 : vector<1x32xi1>, vector<1x32xf32>
    %9 = vector.broadcast %8 : vector<1x32xf32> to vector<32x32xf32>
    %10 = arith.mulf %2, %9 : vector<32x32xf32>
    %11 = vector.shape_cast %10 : vector<32x32xf32> to vector<1x32x32xf32>
    %c0_5 = arith.constant 0 : index
    %c0_6 = arith.constant 0 : index
    %12 = vector.load %arg5[%c0_5, %c0_6] : memref<2x32xf32, #tpu.memory_space<vmem>>, vector<2x32xf32>
    %13 = vector.shape_cast %12 : vector<2x32xf32> to vector<1x2x32xf32>
    %c0_7 = arith.constant 0 : index
    %c0_8 = arith.constant 0 : index
    %14 = vector.load %arg6[%c0_7, %c0_8] : memref<32x2xf32, #tpu.memory_space<vmem>>, vector<32x2xf32>
    %15 = vector.shape_cast %14 : vector<32x2xf32> to vector<1x32x2xf32>
    %c0_9 = arith.constant 0 : index
    %c0_10 = arith.constant 0 : index
    %16 = vector.load %arg7[%c0_9, %c0_10] : memref<32x2xf32, #tpu.memory_space<vmem>>, vector<32x2xf32>
    %17 = vector.shape_cast %16 : vector<32x2xf32> to vector<1x32x2xf32>
    "tpu.trace_start"() <{level = 10 : i32, message = "bmc,bcx->bmx"}> : () -> ()
    %cst_11 = arith.constant dense<0.000000e+00> : vector<1x2x32xf32>
    %18 = tpu.matmul %13, %11, %cst_11 {dimension_numbers = #tpu.dot_dimension_numbers<[2], [1], [1], [2], [0, 0, 0, 1, 1, 2], [0], [0]>} : vector<1x2x32xf32>, vector<1x32x32xf32>, vector<1x2x32xf32> -> vector<1x2x32xf32>
    "tpu.trace_stop"() : () -> ()
    %cst_12 = arith.constant 0.000000e+00 : f32
    %19 = vector.broadcast %cst_12 : f32 to vector<1x2x32xf32>
    %20 = arith.maximumf %18, %19 : vector<1x2x32xf32>
    %21 = vector.extract_strided_slice %20 {offsets = [0, 0, 0], sizes = [1, 2, 16], strides = [1, 1, 1]} : vector<1x2x32xf32> to vector<1x2x16xf32>
    "tpu.trace_start"() <{level = 10 : i32, message = "bcm,bmh->bch"}> : () -> ()
    %cst_13 = arith.constant dense<0.000000e+00> : vector<1x32x16xf32>
    %22 = tpu.matmul %15, %21, %cst_13 {dimension_numbers = #tpu.dot_dimension_numbers<[2], [1], [1], [2], [0, 0, 0, 1, 1, 2], [0], [0]>} : vector<1x32x2xf32>, vector<1x2x16xf32>, vector<1x32x16xf32> -> vector<1x32x16xf32>
    "tpu.trace_stop"() : () -> ()
    %cst_14 = arith.constant 0.000000e+00 : f32
    %23 = vector.broadcast %cst_14 : f32 to vector<1x32x16xf32>
    %24 = arith.subf %23, %22 : vector<1x32x16xf32>
    %25 = math.exp %24 : vector<1x32x16xf32>
    %cst_15 = arith.constant 1.000000e+00 : f32
    %26 = vector.broadcast %cst_15 : f32 to vector<1x32x16xf32>
    %27 = arith.addf %26, %25 : vector<1x32x16xf32>
    %cst_16 = arith.constant 1.000000e+00 : f32
    %28 = vector.broadcast %cst_16 : f32 to vector<1x32x16xf32>
    %29 = arith.divf %28, %27 : vector<1x32x16xf32>
    %30 = vector.extract_strided_slice %20 {offsets = [0, 0, 16], sizes = [1, 2, 16], strides = [1, 1, 1]} : vector<1x2x32xf32> to vector<1x2x16xf32>
    "tpu.trace_start"() <{level = 10 : i32, message = "bcm,bmw->bcw"}> : () -> ()
    %cst_17 = arith.constant dense<0.000000e+00> : vector<1x32x16xf32>
    %31 = tpu.matmul %17, %30, %cst_17 {dimension_numbers = #tpu.dot_dimension_numbers<[2], [1], [1], [2], [0, 0, 0, 1, 1, 2], [0], [0]>} : vector<1x32x2xf32>, vector<1x2x16xf32>, vector<1x32x16xf32> -> vector<1x32x16xf32>
    "tpu.trace_stop"() : () -> ()
    %cst_18 = arith.constant 0.000000e+00 : f32
    %32 = vector.broadcast %cst_18 : f32 to vector<1x32x16xf32>
    %33 = arith.subf %32, %31 : vector<1x32x16xf32>
    %34 = math.exp %33 : vector<1x32x16xf32>
    %cst_19 = arith.constant 1.000000e+00 : f32
    %35 = vector.broadcast %cst_19 : f32 to vector<1x32x16xf32>
    %36 = arith.addf %35, %34 : vector<1x32x16xf32>
    %cst_20 = arith.constant 1.000000e+00 : f32
    %37 = vector.broadcast %cst_20 : f32 to vector<1x32x16xf32>
    %38 = arith.divf %37, %36 : vector<1x32x16xf32>
    %39 = vector.shape_cast %29 : vector<1x32x16xf32> to vector<32x16xf32>
    %c0_21 = arith.constant 0 : index
    %c0_22 = arith.constant 0 : index
    %40 = vector.load %arg3[%c0_21, %c0_22] : memref<16x256xf32, #tpu.memory_space<vmem>>, vector<16x256xf32>
    %cst_23 = arith.constant dense<0.000000e+00> : vector<32x256xf32>
    %41 = tpu.matmul %39, %40, %cst_23 {dimension_numbers = #tpu.dot_dimension_numbers<[1], [0], [0], [1], [0, 0, 1, 1], [], []>} : vector<32x16xf32>, vector<16x256xf32>, vector<32x256xf32> -> vector<32x256xf32>
    %42 = vector.shape_cast %38 : vector<1x32x16xf32> to vector<32x16xf32>
    %c0_24 = arith.constant 0 : index
    %c0_25 = arith.constant 0 : index
    %43 = vector.load %arg4[%c0_24, %c0_25] : memref<16x256xf32, #tpu.memory_space<vmem>>, vector<16x256xf32>
    %cst_26 = arith.constant dense<0.000000e+00> : vector<32x256xf32>
    %44 = tpu.matmul %42, %43, %cst_26 {dimension_numbers = #tpu.dot_dimension_numbers<[1], [0], [0], [1], [0, 0, 1, 1], [], []>} : vector<32x16xf32>, vector<16x256xf32>, vector<32x256xf32> -> vector<32x256xf32>
    %45 = arith.mulf %41, %44 : vector<32x256xf32>
    %46 = arith.mulf %0, %45 : vector<32x256xf32>
    %c0_27 = arith.constant 0 : index
    %c0_28 = arith.constant 0 : index
    %47 = vector.load %arg8[%c0_27, %c0_28] : memref<32x256xf32, #tpu.memory_space<vmem>>, vector<32x256xf32>
    tpu.vector_store %arg8[%c0_27, %c0_28], %46 {strides = array<i32>} : memref<32x256xf32, #tpu.memory_space<vmem>>, vector<32x256xf32>,
    return
  }
  func.func @transform_0(%arg0: i32) -> (i32, i32) {
    %c0_i32 = arith.constant 0 : i32
    %c0_i32_0 = arith.constant 0 : i32
    return %arg0, %c0_i32 : i32, i32
  }
  func.func @transform_1(%arg0: i32) -> (i32, i32) {
    %c0_i32 = arith.constant 0 : i32
    %c0_i32_0 = arith.constant 0 : i32
    %c0_i32_1 = arith.constant 0 : i32
    return %c0_i32, %c0_i32_0 : i32, i32
  }
  func.func @transform_2(%arg0: i32) -> (i32, i32) {
    %c0_i32 = arith.constant 0 : i32
    %c0_i32_0 = arith.constant 0 : i32
    %c0_i32_1 = arith.constant 0 : i32
    return %c0_i32, %c0_i32_0 : i32, i32
  }
  func.func @transform_3(%arg0: i32) -> (i32, i32) {
    %c0_i32 = arith.constant 0 : i32
    %c0_i32_0 = arith.constant 0 : i32
    %c0_i32_1 = arith.constant 0 : i32
    return %c0_i32, %c0_i32_0 : i32, i32
  }
  func.func @transform_4(%arg0: i32) -> (i32, i32) {
    %c0_i32 = arith.constant 0 : i32
    %c0_i32_0 = arith.constant 0 : i32
    %c0_i32_1 = arith.constant 0 : i32
    return %c0_i32, %c0_i32_0 : i32, i32
  }
  func.func @transform_5(%arg0: i32) -> (i32, i32) {
    %c0_i32 = arith.constant 0 : i32
    %c0_i32_0 = arith.constant 0 : i32
    %c0_i32_1 = arith.constant 0 : i32
    return %c0_i32, %c0_i32_0 : i32, i32
  }
  func.func @transform_6(%arg0: i32) -> (i32, i32) {
    %c0_i32 = arith.constant 0 : i32
    %c0_i32_0 = arith.constant 0 : i32
    %c0_i32_1 = arith.constant 0 : i32
    return %c0_i32, %c0_i32_0 : i32, i32
  }
  func.func @transform_7(%arg0: i32) -> (i32, i32) {
    %c0_i32 = arith.constant 0 : i32
    %c0_i32_0 = arith.constant 0 : i32
    return %arg0, %c0_i32 : i32, i32
  }
}

</mosaic_0001>

<llo_original>
// kernel: tpu_custom_call.1
$region0: #{tpu_custom_call.1}
  #allocation0 [shape = 'u32[]', space=smem, size = 0x4, offset = 0x4, fixed_abs, tag = 'smem constant byte address 0x4 - core index']
  #allocation1 [shape = 'u32[144,128]{1,0:T(1,128)}', space=vmem, size = 0x12000, scoped, tag = 'internal scratch']
  %s0 = inlined_call_operand.vmem [shape: f32[64,256], index: 0, kind: input, shape index: {}]
  %s1 = inlined_call_operand.vmem [shape: f32[256,32], index: 1, kind: input, shape index: {}]
  %s2 = inlined_call_operand.vmem [shape: f32[16,256], index: 2, kind: input, shape index: {}]
  %s3 = inlined_call_operand.vmem [shape: f32[16,256], index: 3, kind: input, shape index: {}]
  %s4 = inlined_call_operand.vmem [shape: f32[2,32], index: 4, kind: input, shape index: {}]
  %s5 = inlined_call_operand.vmem [shape: f32[32,2], index: 5, kind: input, shape index: {}]
  %s6 = inlined_call_operand.vmem [shape: f32[32,2], index: 6, kind: input, shape index: {}]
  %s7 = inlined_call_operand.hbm [shape: f32[64,256], index: 7, kind: output, shape index: {}]
  %s8 = sld [smem:[#allocation0]]
  $region61: #{tpu_custom_call.1} parent=0
    _
  %s10 = ssub.s32 1, %s8
  %s11 = scalar_select 0, %s10, %s8
  $region1: #{tpu_custom_call.1} parent=0
    #allocation2 [shape = 'u8[65536]{0}', space=vmem, size = 0x10000, scoped, tag = 'output window, operand 0']
    #allocation3 [shape = 's32[2]{0}', space=sflag, size = 0x8, scoped, tag = 'scoped memory for tpu_custom_call.1']
    %12 = vsyncpa [#allocation3], 0
    %s13 = scalar_lea.sflag [#allocation3], 1
    %14 = vsyncpa %s13, 0
    loop: start=0, step=1, limit=4
    $region2: #{tpu_custom_call.1} parent=1 // loop_pre_header
      _
    $region3: #{tpu_custom_call.1} parent=1 // loop_header
      %s16 = sphi 0, %s20
      %p17 = scmp.ge.s32.totalorder %s16, 4
      %s26 = sphi 0, %s28
      %s29 = sphi 0, %s26
      %s30 = sphi 0, %s29
      %s46 = sphi 0, %s30
      %s50 = sphi 0, %s50
      %s52 = sphi 0, %s50
      %s53 = sphi 0, %s52
      %s67 = sphi 0, %s53
      %s71 = sphi 0, %s71
      %s73 = sphi 0, %s71
      %s74 = sphi 0, %s73
      %s88 = sphi 0, %s74
      %s92 = sphi 0, %s92
      %s94 = sphi 0, %s92
      %s95 = sphi 0, %s94
      %s109 = sphi 0, %s95
      %s113 = sphi 0, %s113
      %s115 = sphi 0, %s113
      %s116 = sphi 0, %s115
      %s130 = sphi 0, %s116
      %s134 = sphi 0, %s134
      %s136 = sphi 0, %s134
      %s137 = sphi 0, %s136
      %s151 = sphi 0, %s137
      %s155 = sphi 0, %s155
      %s157 = sphi 0, %s155
      %s158 = sphi 0, %s157
      %s172 = sphi 0, %s158
      %s178 = sphi 0, %s180
      %s181 = sphi 0, %s178
      %s182 = sphi 0, %s181
      %s198 = sphi 0, %s182
    $region4: #{tpu_custom_call.1} parent=1 // loop_header_branch
      %19 = sbr.rel (%p17) target = $region8
    $region5: #{tpu_custom_call.1} parent=1 // loop_body
      %s21 = ssub.s32 %s16, 1
      %s22 = ssub.s32 %s16, 2
      %s23 = sadd.s32 %s16, 1
      %s24 = ssub.s32 %s16, %s23
      %p25 = scmp.eq.s32.totalorder %s24, 0
      %s27 = sadd.s32 %s26, 1
      %s28 = scalar_select %p25, %s26, %s27
      %p31 = pneg %p25
      %p32 = scmp.eq.s32.totalorder %s16, 1
      %p33 = por %p31, %p32
      %p34 = scmp.ne.s32.totalorder %s26, %s29
      %p35 = scmp.eq.s32.totalorder %s16, 0
      %p36 = por %p34, %p35
      %p37 = scmp.ne.s32.totalorder %s26, %s29
      %p38 = scmp.eq.s32.totalorder %s21, 1
      %p39 = por %p37, %p38
      %p40 = scmp.ne.s32.totalorder %s29, %s30
      %p41 = scmp.eq.s32.totalorder %s21, 0
      %p42 = por %p40, %p41
      %p43 = scmp.ne.s32.totalorder %s29, %s30
      %p44 = scmp.eq.s32.totalorder %s22, 1
      %p45 = por %p43, %p44
      %p47 = scmp.ne.s32.totalorder %s30, %s46
      %p48 = scmp.eq.s32.totalorder %s22, 0
      %p49 = por %p47, %p48
      %s51 = sadd.s32 %s50, 1
      %p54 = scmp.eq.s32.totalorder %s16, 1
      %p55 = scmp.ne.s32.totalorder %s50, %s52
      %p56 = scmp.eq.s32.totalorder %s16, 0
      %p57 = por %p55, %p56
      %p58 = scmp.ne.s32.totalorder %s50, %s52
      %p59 = scmp.eq.s32.totalorder %s21, 1
      %p60 = por %p58, %p59
      %p61 = scmp.ne.s32.totalorder %s52, %s53
      %p62 = scmp.eq.s32.totalorder %s21, 0
      %p63 = por %p61, %p62
      %p64 = scmp.ne.s32.totalorder %s52, %s53
      %p65 = scmp.eq.s32.totalorder %s22, 1
      %p66 = por %p64, %p65
      %p68 = scmp.ne.s32.totalorder %s53, %s67
      %p69 = scmp.eq.s32.totalorder %s22, 0
      %p70 = por %p68, %p69
      %s72 = sadd.s32 %s71, 1
      %p75 = scmp.eq.s32.totalorder %s16, 1
      %p76 = scmp.ne.s32.totalorder %s71, %s73
      %p77 = scmp.eq.s32.totalorder %s16, 0
      %p78 = por %p76, %p77
      %p79 = scmp.ne.s32.totalorder %s71, %s73
      %p80 = scmp.eq.s32.totalorder %s21, 1
      %p81 = por %p79, %p80
      %p82 = scmp.ne.s32.totalorder %s73, %s74
      %p83 = scmp.eq.s32.totalorder %s21, 0
      %p84 = por %p82, %p83
      %p85 = scmp.ne.s32.totalorder %s73, %s74
      %p86 = scmp.eq.s32.totalorder %s22, 1
      %p87 = por %p85, %p86
      %p89 = scmp.ne.s32.totalorder %s74, %s88
      %p90 = scmp.eq.s32.totalorder %s22, 0
      %p91 = por %p89, %p90
      %s93 = sadd.s32 %s92, 1
      %p96 = scmp.eq.s32.totalorder %s16, 1
      %p97 = scmp.ne.s32.totalorder %s92, %s94
      %p98 = scmp.eq.s32.totalorder %s16, 0
      %p99 = por %p97, %p98
      %p100 = scmp.ne.s32.totalorder %s92, %s94
      %p101 = scmp.eq.s32.totalorder %s21, 1
      %p102 = por %p100, %p101
      %p103 = scmp.ne.s32.totalorder %s94, %s95
      %p104 = scmp.eq.s32.totalorder %s21, 0
      %p105 = por %p103, %p104
      %p106 = scmp.ne.s32.totalorder %s94, %s95
      %p107 = scmp.eq.s32.totalorder %s22, 1
      %p108 = por %p106, %p107
      %p110 = scmp.ne.s32.totalorder %s95, %s109
      %p111 = scmp.eq.s32.totalorder %s22, 0
      %p112 = por %p110, %p111
      %s114 = sadd.s32 %s113, 1
      %p117 = scmp.eq.s32.totalorder %s16, 1
      %p118 = scmp.ne.s32.totalorder %s113, %s115
      %p119 = scmp.eq.s32.totalorder %s16, 0
      %p120 = por %p118, %p119
      %p121 = scmp.ne.s32.totalorder %s113, %s115
      %p122 = scmp.eq.s32.totalorder %s21, 1
      %p123 = por %p121, %p122
      %p124 = scmp.ne.s32.totalorder %s115, %s116
      %p125 = scmp.eq.s32.totalorder %s21, 0
      %p126 = por %p124, %p125
      %p127 = scmp.ne.s32.totalorder %s115, %s116
      %p128 = scmp.eq.s32.totalorder %s22, 1
      %p129 = por %p127, %p128
      %p131 = scmp.ne.s32.totalorder %s116, %s130
      %p132 = scmp.eq.s32.totalorder %s22, 0
      %p133 = por %p131, %p132
      %s135 = sadd.s32 %s134, 1
      %p138 = scmp.eq.s32.totalorder %s16, 1
      %p139 = scmp.ne.s32.totalorder %s134, %s136
      %p140 = scmp.eq.s32.totalorder %s16, 0
      %p141 = por %p139, %p140
      %p142 = scmp.ne.s32.totalorder %s134, %s136
      %p143 = scmp.eq.s32.totalorder %s21, 1
      %p144 = por %p142, %p143
      %p145 = scmp.ne.s32.totalorder %s136, %s137
      %p146 = scmp.eq.s32.totalorder %s21, 0
      %p147 = por %p145, %p146
      %p148 = scmp.ne.s32.totalorder %s136, %s137
      %p149 = scmp.eq.s32.totalorder %s22, 1
      %p150 = por %p148, %p149
      %p152 = scmp.ne.s32.totalorder %s137, %s151
      %p153 = scmp.eq.s32.totalorder %s22, 0
      %p154 = por %p152, %p153
      %s156 = sadd.s32 %s155, 1
      %p159 = scmp.eq.s32.totalorder %s16, 1
      %p160 = scmp.ne.s32.totalorder %s155, %s157
      %p161 = scmp.eq.s32.totalorder %s16, 0
      %p162 = por %p160, %p161
      %p163 = scmp.ne.s32.totalorder %s155, %s157
      %p164 = scmp.eq.s32.totalorder %s21, 1
      %p165 = por %p163, %p164
      %p166 = scmp.ne.s32.totalorder %s157, %s158
      %p167 = scmp.eq.s32.totalorder %s21, 0
      %p168 = por %p166, %p167
      %p169 = scmp.ne.s32.totalorder %s157, %s158
      %p170 = scmp.eq.s32.totalorder %s22, 1
      %p171 = por %p169, %p170
      %p173 = scmp.ne.s32.totalorder %s158, %s172
      %p174 = scmp.eq.s32.totalorder %s22, 0
      %p175 = por %p173, %p174
      %s176 = ssub.s32 %s16, %s23
      %p177 = scmp.eq.s32.totalorder %s176, 0
      %s179 = sadd.s32 %s178, 1
      %s180 = scalar_select %p177, %s178, %s179
      %p183 = pneg %p177
      %p184 = scmp.eq.s32.totalorder %s16, 1
      %p185 = por %p183, %p184
      %p186 = scmp.ne.s32.totalorder %s178, %s181
      %p187 = scmp.eq.s32.totalorder %s16, 0
      %p188 = por %p186, %p187
      %p189 = scmp.ne.s32.totalorder %s178, %s181
      %p190 = scmp.eq.s32.totalorder %s21, 1
      %p191 = por %p189, %p190
      %p192 = scmp.ne.s32.totalorder %s181, %s182
      %p193 = scmp.eq.s32.totalorder %s21, 0
      %p194 = por %p192, %p193
      %p195 = scmp.ne.s32.totalorder %s181, %s182
      %p196 = scmp.eq.s32.totalorder %s22, 1
      %p197 = por %p195, %p196
      %p199 = scmp.ne.s32.totalorder %s182, %s198
      %p200 = scmp.eq.s32.totalorder %s22, 0
      %p201 = por %p199, %p200
      %p202 = scmp.le.s32.totalorder 1, %s16
      %p203 = scmp.lt.s32.totalorder %s16, 3
      %p204 = pnand %p202, %p203
      %p205 = pneg %p204
      // Predicated region
      $region9: #{tpu_custom_call.1} parent=5 // pred_check
        _
      $region10: #{tpu_custom_call.1} parent=5 // pred_check_branch
        %207 = sbr.rel (%p204) target = $region12
      $region11: #{tpu_custom_call.1} parent=5 // pred_region
        %s208 = ssub.s32 %s16, 1
        // Predicated region
        $region13: #{tpu_custom_call.1} parent=11 // pred_check
          %p209 = pneg %p63
        $region14: #{tpu_custom_call.1} parent=11 // pred_check_branch
          %211 = sbr.rel (%p209) target = $region16
        $region15: #{tpu_custom_call.1} parent=11 // pred_region
          _
        $region16: #{tpu_custom_call.1} parent=11 // pred_fallthru
          _
        // Predicated region
        $region17: #{tpu_custom_call.1} parent=11 // pred_check
          %p212 = pneg %p84
        $region18: #{tpu_custom_call.1} parent=11 // pred_check_branch
          %214 = sbr.rel (%p212) target = $region20
        $region19: #{tpu_custom_call.1} parent=11 // pred_region
          _
        $region20: #{tpu_custom_call.1} parent=11 // pred_fallthru
          _
        // Predicated region
        $region21: #{tpu_custom_call.1} parent=11 // pred_check
          %p215 = pneg %p105
        $region22: #{tpu_custom_call.1} parent=11 // pred_check_branch
          %217 = sbr.rel (%p215) target = $region24
        $region23: #{tpu_custom_call.1} parent=11 // pred_region
          _
        $region24: #{tpu_custom_call.1} parent=11 // pred_fallthru
          _
        // Predicated region
        $region25: #{tpu_custom_call.1} parent=11 // pred_check
          %p218 = pneg %p126
        $region26: #{tpu_custom_call.1} parent=11 // pred_check_branch
          %220 = sbr.rel (%p218) target = $region28
        $region27: #{tpu_custom_call.1} parent=11 // pred_region
          _
        $region28: #{tpu_custom_call.1} parent=11 // pred_fallthru
          _
        // Predicated region
        $region29: #{tpu_custom_call.1} parent=11 // pred_check
          %p221 = pneg %p147
        $region30: #{tpu_custom_call.1} parent=11 // pred_check_branch
          %223 = sbr.rel (%p221) target = $region32
        $region31: #{tpu_custom_call.1} parent=11 // pred_region
          _
        $region32: #{tpu_custom_call.1} parent=11 // pred_fallthru
          _
        // Predicated region
        $region33: #{tpu_custom_call.1} parent=11 // pred_check
          %p224 = pneg %p168
        $region34: #{tpu_custom_call.1} parent=11 // pred_check_branch
          %226 = sbr.rel (%p224) target = $region36
        $region35: #{tpu_custom_call.1} parent=11 // pred_region
          _
        $region36: #{tpu_custom_call.1} parent=11 // pred_fallthru
          _
      $region12: #{tpu_custom_call.1} parent=5 // pred_fallthru
        _
      %p227 = scmp.lt.s32.totalorder %s16, 2
      // Predicated region
      $region37: #{tpu_custom_call.1} parent=5 // pred_check
        %p228 = pneg %p227
      $region38: #{tpu_custom_call.1} parent=5 // pred_check_branch
        %230 = sbr.rel (%p228) target = $region40
      $region39: #{tpu_custom_call.1} parent=5 // pred_region
        // Predicated region
        $region41: #{tpu_custom_call.1} parent=39 // pred_check
          %p231 = pneg %p36
        $region42: #{tpu_custom_call.1} parent=39 // pred_check_branch
          %233 = sbr.rel (%p231) target = $region44
        $region43: #{tpu_custom_call.1} parent=39 // pred_region
          %s234 = smul.u32 4, %s16
          %p235 = scmp.lt.s32.totalorder %s234, 7
          %s236 = scalar_select %p235, %s234, 7
          %s237 = smul.addr %s236, 2
          %s238 = smul.addr %s237, 8
          %s239 = scalar_lea.vmem %s0, %s238
          %s240 = smul.u32 4, %s16
        $region44: #{tpu_custom_call.1} parent=39 // pred_fallthru
          _
      $region40: #{tpu_custom_call.1} parent=5 // pred_fallthru
        _
      %p241 = scmp.le.s32.totalorder 1, %s16
      %p242 = scmp.lt.s32.totalorder %s16, 3
      %p243 = pnand %p241, %p242
      %p244 = pneg %p243
      // Predicated region
      $region45: #{tpu_custom_call.1} parent=5 // pred_check
        _
      $region46: #{tpu_custom_call.1} parent=5 // pred_check_branch
        %246 = sbr.rel (%p243) target = $region48
      $region47: #{tpu_custom_call.1} parent=5 // pred_region
        %s247 = ssub.s32 %s16, 1
        %s248 = smul.u32 4, %s21
        %p249 = scmp.lt.s32.totalorder %s248, 7
        %s250 = scalar_select %p249, %s248, 7
        %s251 = smul.addr %s250, 2
        %s252 = smul.addr %s251, 8
        %s253 = scalar_lea.vmem %s0, %s252
        %p254 = pneg %p42
        %p255 = pneg %p39
        %p256 = pneg %p63
        %p257 = pneg %p60
        %p258 = pneg %p84
        %p259 = pneg %p81
        %p260 = pneg %p105
        %p261 = pneg %p102
        %p262 = pneg %p126
        %p263 = pneg %p123
        %p264 = pneg %p147
        %p265 = pneg %p144
        %p266 = pneg %p168
        %p267 = pneg %p165
        %p268 = pneg %p194
        %p269 = pneg %p191
        %s270 = sand.u32 %s181, 1
        %s271 = scalar_lea.sflag [#allocation3], %s270
        %s272 = sand.u32 %s181, 1
        %s273 = smul.addr %s272, 64
        %s274 = scalar_lea.vmem [#allocation2], %s273
        %s275 = smul.u32 4, %s21
        %p276 = scmp.lt.s32.totalorder %s275, 7
        %s277 = scalar_select %p276, %s275, 7
        %s278 = smul.addr %s277, 2
        %s279 = smul.addr %s278, 8
        %s280 = scalar_lea.vmem %s0, %s279
        %s281 = smul.u32 4, %s21
        %s282 = smul.u32 4, %s21
        %v283 = vld [vmem:[%s280] sm:$0xff]
        %v284 = vld [vmem:[%s280 + $0x8] sm:$0xff]
        %v285 = vld [vmem:[%s280 + $0x10] sm:$0xff]
        %v286 = vld [vmem:[%s280 + $0x18] sm:$0xff]
        %v287 = vld [vmem:[%s280 + $0x20] sm:$0xff]
        %v288 = vld [vmem:[%s280 + $0x28] sm:$0xff]
        %v289 = vld [vmem:[%s280 + $0x30] sm:$0xff]
        %v290 = vld [vmem:[%s280 + $0x38] sm:$0xff]
        %v291 = vld [vmem:[%s1] sm:$0xff]
        %v292 = vld [vmem:[%s1 + $0x8] sm:$0xff]
        %v293 = vld [vmem:[%s1 + $0x10] sm:$0xff]
        %v294 = vld [vmem:[%s1 + $0x18] sm:$0xff]
        %v295 = vld [vmem:[%s1 + $0x20] sm:$0xff]
        %v296 = vld [vmem:[%s1 + $0x28] sm:$0xff]
        %v297 = vld [vmem:[%s1 + $0x30] sm:$0xff]
        %v298 = vld [vmem:[%s1 + $0x38] sm:$0xff]
        %v299 = vld [vmem:[%s1 + $0x40] sm:$0xff]
        %v300 = vld [vmem:[%s1 + $0x48] sm:$0xff]
        %v301 = vld [vmem:[%s1 + $0x50] sm:$0xff]
        %v302 = vld [vmem:[%s1 + $0x58] sm:$0xff]
        %v303 = vld [vmem:[%s1 + $0x60] sm:$0xff]
        %v304 = vld [vmem:[%s1 + $0x68] sm:$0xff]
        %v305 = vld [vmem:[%s1 + $0x70] sm:$0xff]
        %v306 = vld [vmem:[%s1 + $0x78] sm:$0xff]
        %v307 = vld [vmem:[%s1 + $0x80] sm:$0xff]
        %v308 = vld [vmem:[%s1 + $0x88] sm:$0xff]
        %v309 = vld [vmem:[%s1 + $0x90] sm:$0xff]
        %v310 = vld [vmem:[%s1 + $0x98] sm:$0xff]
        %v311 = vld [vmem:[%s1 + $0xa0] sm:$0xff]
        %v312 = vld [vmem:[%s1 + $0xa8] sm:$0xff]
        %v313 = vld [vmem:[%s1 + $0xb0] sm:$0xff]
        %v314 = vld [vmem:[%s1 + $0xb8] sm:$0xff]
        %v315 = vld [vmem:[%s1 + $0xc0] sm:$0xff]
        %v316 = vld [vmem:[%s1 + $0xc8] sm:$0xff]
        %v317 = vld [vmem:[%s1 + $0xd0] sm:$0xff]
        %v318 = vld [vmem:[%s1 + $0xd8] sm:$0xff]
        %v319 = vld [vmem:[%s1 + $0xe0] sm:$0xff]
        %v320 = vld [vmem:[%s1 + $0xe8] sm:$0xff]
        %v321 = vld [vmem:[%s1 + $0xf0] sm:$0xff]
        %v322 = vld [vmem:[%s1 + $0xf8] sm:$0xff]
        %323 = vmatprep.subr.mxu0 0.0
        %324 = vmatpush1.msra.mxu0 %v291
        %325 = vmatprep.subr.mxu0 0.0
        %326 = vmatpush1.msra.mxu0 %v292
        %327 = vmatprep.subr.mxu0 0.0
        %328 = vmatpush1.msra.mxu0 %v293
        %329 = vmatprep.subr.mxu0 0.0
        %330 = vmatpush1.msra.mxu0 %v294
        %331 = vmatprep.subr.mxu0 0.0
        %332 = vmatpush1.msra.mxu0 %v295
        %333 = vmatprep.subr.mxu0 0.0
        %334 = vmatpush1.msra.mxu0 %v296
        %335 = vmatprep.subr.mxu0 0.0
        %336 = vmatpush1.msra.mxu0 %v297
        %337 = vmatprep.subr.mxu0 0.0
        %338 = vmatpush1.msra.mxu0 %v298
        %339 = vmatprep.subr.mxu0 0.0
        %340 = vmatpush1.msra.mxu0 %v299
        %341 = vmatprep.subr.mxu0 0.0
        %342 = vmatpush1.msra.mxu0 %v300
        %343 = vmatprep.subr.mxu0 0.0
        %344 = vmatpush1.msra.mxu0 %v301
        %345 = vmatprep.subr.mxu0 0.0
        %346 = vmatpush1.msra.mxu0 %v302
        %347 = vmatprep.subr.mxu0 0.0
        %348 = vmatpush1.msra.mxu0 %v303
        %349 = vmatprep.subr.mxu0 0.0
        %350 = vmatpush1.msra.mxu0 %v304
        %351 = vmatprep.subr.mxu0 0.0
        %352 = vmatpush1.msra.mxu0 %v305
        %353 = vmatprep.subr.mxu0 0.0
        %354 = vmatpush1.msra.mxu0 %v306
        %355 = vmatprep.subr.mxu0 0.0
        %356 = vmatpush1.msra.mxu0 %v307
        %357 = vmatprep.subr.mxu0 0.0
        %358 = vmatpush1.msra.mxu0 %v308
        %359 = vmatprep.subr.mxu0 0.0
        %360 = vmatpush1.msra.mxu0 %v309
        %361 = vmatprep.subr.mxu0 0.0
        %362 = vmatpush1.msra.mxu0 %v310
        %363 = vmatprep.subr.mxu0 0.0
        %364 = vmatpush1.msra.mxu0 %v311
        %365 = vmatprep.subr.mxu0 0.0
        %366 = vmatpush1.msra.mxu0 %v312
        %367 = vmatprep.subr.mxu0 0.0
        %368 = vmatpush1.msra.mxu0 %v313
        %369 = vmatprep.subr.mxu0 0.0
        %370 = vmatpush1.msra.mxu0 %v314
        %371 = vmatprep.subr.mxu0 0.0
        %372 = vmatpush1.msra.mxu0 %v315
        %373 = vmatprep.subr.mxu0 0.0
        %374 = vmatpush1.msra.mxu0 %v316
        %375 = vmatprep.subr.mxu0 0.0
        %376 = vmatpush1.msra.mxu0 %v317
        %377 = vmatprep.subr.mxu0 0.0
        %378 = vmatpush1.msra.mxu0 %v318
        %379 = vmatprep.subr.mxu0 0.0
        %380 = vmatpush1.msra.mxu0 %v319
        %381 = vmatprep.subr.mxu0 0.0
        %382 = vmatpush1.msra.mxu0 %v320
        %383 = vmatprep.subr.mxu0 0.0
        %384 = vmatpush1.msra.mxu0 %v321
        %385 = vmatprep.subr.mxu0 0.0
        %386 = vmatpush1.msra.mxu0 %v322
        %387 = vmatprep.mubr.f32.mxu0 %v284
        %388 = vmatmul.mubr.f32.gmra.mrb[0].mxu0 %v283
        %v389 = vpop.f32.mrb[0].mxu0
        %v390 = vadd.f32 0.0, %v389
        %v391 = vpop.f32.mrb[0].mxu0
        %392 = vmatprep.mubr.f32.mxu0 %v286
        %393 = vmatmul.mubr.f32.gmra.mrb[0].mxu0 %v285
        %v394 = vpop.f32.mrb[0].mxu0
        %v395 = vadd.f32 0.0, %v394
        %v396 = vpop.f32.mrb[0].mxu0
        %397 = vmatprep.mubr.f32.mxu0 %v288
        %398 = vmatmul.mubr.f32.gmra.mrb[0].mxu0 %v287
        %v399 = vpop.f32.mrb[0].mxu0
        %v400 = vadd.f32 0.0, %v399
        %v401 = vpop.f32.mrb[0].mxu0
        %402 = vmatprep.mubr.f32.mxu0 %v290
        %403 = vmatmul.mubr.f32.gmra.mrb[0].mxu0 %v289
        %v404 = vpop.f32.mrb[0].mxu0
        %v405 = vadd.f32 0.0, %v404
        %v406 = vpop.f32.mrb[0].mxu0
        %407 = vdwg.mxu0
        %v408 = vmul.f32 %v390, 0.0625
        %v409 = vmul.f32 %v395, 0.0625
        %v410 = vmul.f32 %v400, 0.0625
        %v411 = vmul.f32 %v405, 0.0625
        %v412 = vld [vmem:[%s4] sm:$0x3]
        %v413 = vld [vmem:[%s5] sm:$0xff]
        %v414 = vld [vmem:[%s5 + $0x8] sm:$0xff]
        %v415 = vld [vmem:[%s5 + $0x10] sm:$0xff]
        %v416 = vld [vmem:[%s5 + $0x18] sm:$0xff]
        %v417 = vld [vmem:[%s6] sm:$0xff]
        %v418 = vld [vmem:[%s6 + $0x8] sm:$0xff]
        %v419 = vld [vmem:[%s6 + $0x10] sm:$0xff]
        %v420 = vld [vmem:[%s6 + $0x18] sm:$0xff]
        %vm421 = vcmask 261120
        %v423 = vsel %vm421, %v412, 0
        %425 = vmatprep.subr.mxu0 0.0
        %426 = vmatpush1.msra.mxu0 %v408
        %427 = vmatprep.subr.mxu0 0.0
        %428 = vmatpush1.msra.mxu0 %v409
        %429 = vmatprep.subr.mxu0 0.0
        %430 = vmatpush1.msra.mxu0 %v410
        %431 = vmatprep.subr.mxu0 0.0
        %432 = vmatpush1.msra.mxu0 %v411
        %433 = vmatprep.subr.mxu0 0.0
        %434 = vmatpush1.msra.mxu0 0.0
        %435 = vmatprep.subr.mxu0 0.0
        %436 = vmatpush1.msra.mxu0 0.0
        %437 = vmatprep.subr.mxu0 0.0
        %438 = vmatpush1.msra.mxu0 0.0
        %439 = vmatprep.subr.mxu0 0.0
        %440 = vmatpush1.msra.mxu0 0.0
        %441 = vmatprep.subr.mxu0 0.0
        %442 = vmatpush1.msra.mxu0 0.0
        %443 = vmatprep.subr.mxu0 0.0
        %444 = vmatpush1.msra.mxu0 0.0
        %445 = vmatprep.subr.mxu0 0.0
        %446 = vmatpush1.msra.mxu0 0.0
        %447 = vmatprep.subr.mxu0 0.0
        %448 = vmatpush1.msra.mxu0 0.0
        %449 = vmatprep.subr.mxu0 0.0
        %450 = vmatpush1.msra.mxu0 0.0
        %451 = vmatprep.subr.mxu0 0.0
        %452 = vmatpush1.msra.mxu0 0.0
        %453 = vmatprep.subr.mxu0 0.0
        %454 = vmatpush1.msra.mxu0 0.0
        %455 = vmatprep.subr.mxu0 0.0
        %456 = vmatpush1.msra.mxu0 0.0
        %457 = vmatprep.subr.mxu0 0.0
        %458 = vmatpush1.msra.mxu0 0.0
        %459 = vmatprep.subr.mxu0 0.0
        %460 = vmatpush1.msra.mxu0 0.0
        %461 = vmatprep.subr.mxu0 0.0
        %462 = vmatpush1.msra.mxu0 0.0
        %463 = vmatprep.subr.mxu0 0.0
        %464 = vmatpush1.msra.mxu0 0.0
        %465 = vmatprep.subr.mxu0 0.0
        %466 = vmatpush1.msra.mxu0 0.0
        %467 = vmatprep.subr.mxu0 0.0
        %468 = vmatpush1.msra.mxu0 0.0
        %469 = vmatprep.subr.mxu0 0.0
        %470 = vmatpush1.msra.mxu0 0.0
        %471 = vmatprep.subr.mxu0 0.0
        %472 = vmatpush1.msra.mxu0 0.0
        %473 = vmatprep.subr.mxu0 0.0
        %474 = vmatpush1.msra.mxu0 0.0
        %475 = vmatprep.subr.mxu0 0.0
        %476 = vmatpush1.msra.mxu0 0.0
        %477 = vmatprep.subr.mxu0 0.0
        %478 = vmatpush1.msra.mxu0 0.0
        %479 = vmatprep.subr.mxu0 0.0
        %480 = vmatpush1.msra.mxu0 0.0
        %481 = vmatprep.subr.mxu0 0.0
        %482 = vmatpush1.msra.mxu0 0.0
        %483 = vmatprep.subr.mxu0 0.0
        %484 = vmatpush1.msra.mxu0 0.0
        %485 = vmatprep.subr.mxu0 0.0
        %486 = vmatpush1.msra.mxu0 0.0
        %487 = vmatprep.subr.mxu0 0.0
        %488 = vmatpush1.msra.mxu0 0.0
        %489 = vmatprep.mubr.f32.mxu0 0.0
        %490 = vmatmul.mubr.f32.gmra.mrb[0].mxu0 %v423
        %v491 = vpop.f32.mrb[0].mxu0
        %v492 = vadd.f32 0.0, %v491
        %v493 = vpop.f32.mrb[0].mxu0
        %494 = vdwg.mxu0
        %v495 = vmax.f32 %v492, 0.0
        %vm496 = vcmask 15360
        %v498 = vsel %vm496, %v413, 0
        %v501 = vsel %vm496, %v414, 0
        %v504 = vsel %vm496, %v415, 0
        %v507 = vsel %vm496, %v416, 0
        %vm509 = vcmask 1041408
        %v511 = vsel %vm509, %v495, 0
        %513 = vmatprep.subr.mxu0 0.0
        %514 = vmatpush1.msra.mxu0 %v511
        %515 = vmatprep.subr.mxu0 0.0
        %516 = vmatpush1.msra.mxu0 0.0
        %517 = vmatprep.subr.mxu0 0.0
        %518 = vmatpush1.msra.mxu0 0.0
        %519 = vmatprep.subr.mxu0 0.0
        %520 = vmatpush1.msra.mxu0 0.0
        %521 = vmatprep.subr.mxu0 0.0
        %522 = vmatpush1.msra.mxu0 0.0
        %523 = vmatprep.subr.mxu0 0.0
        %524 = vmatpush1.msra.mxu0 0.0
        %525 = vmatprep.subr.mxu0 0.0
        %526 = vmatpush1.msra.mxu0 0.0
        %527 = vmatprep.subr.mxu0 0.0
        %528 = vmatpush1.msra.mxu0 0.0
        %529 = vmatprep.subr.mxu0 0.0
        %530 = vmatpush1.msra.mxu0 0.0
        %531 = vmatprep.subr.mxu0 0.0
        %532 = vmatpush1.msra.mxu0 0.0
        %533 = vmatprep.subr.mxu0 0.0
        %534 = vmatpush1.msra.mxu0 0.0
        %535 = vmatprep.subr.mxu0 0.0
        %536 = vmatpush1.msra.mxu0 0.0
        %537 = vmatprep.subr.mxu0 0.0
        %538 = vmatpush1.msra.mxu0 0.0
        %539 = vmatprep.subr.mxu0 0.0
        %540 = vmatpush1.msra.mxu0 0.0
        %541 = vmatprep.subr.mxu0 0.0
        %542 = vmatpush1.msra.mxu0 0.0
        %543 = vmatprep.subr.mxu0 0.0
        %544 = vmatpush1.msra.mxu0 0.0
        %545 = vmatprep.subr.mxu0 0.0
        %546 = vmatpush1.msra.mxu0 0.0
        %547 = vmatprep.subr.mxu0 0.0
        %548 = vmatpush1.msra.mxu0 0.0
        %549 = vmatprep.subr.mxu0 0.0
        %550 = vmatpush1.msra.mxu0 0.0
        %551 = vmatprep.subr.mxu0 0.0
        %552 = vmatpush1.msra.mxu0 0.0
        %553 = vmatprep.subr.mxu0 0.0
        %554 = vmatpush1.msra.mxu0 0.0
        %555 = vmatprep.subr.mxu0 0.0
        %556 = vmatpush1.msra.mxu0 0.0
        %557 = vmatprep.subr.mxu0 0.0
        %558 = vmatpush1.msra.mxu0 0.0
        %559 = vmatprep.subr.mxu0 0.0
        %560 = vmatpush1.msra.mxu0 0.0
        %561 = vmatprep.subr.mxu0 0.0
        %562 = vmatpush1.msra.mxu0 0.0
        %563 = vmatprep.subr.mxu0 0.0
        %564 = vmatpush1.msra.mxu0 0.0
        %565 = vmatprep.subr.mxu0 0.0
        %566 = vmatpush1.msra.mxu0 0.0
        %567 = vmatprep.subr.mxu0 0.0
        %568 = vmatpush1.msra.mxu0 0.0
        %569 = vmatprep.subr.mxu0 0.0
        %570 = vmatpush1.msra.mxu0 0.0
        %571 = vmatprep.subr.mxu0 0.0
        %572 = vmatpush1.msra.mxu0 0.0
        %573 = vmatprep.subr.mxu0 0.0
        %574 = vmatpush1.msra.mxu0 0.0
        %575 = vmatprep.subr.mxu0 0.0
        %576 = vmatpush1.msra.mxu0 0.0
        %577 = vmatprep.mubr.f32.mxu0 0.0
        %578 = vmatmul.mubr.f32.gmra.mrb[0].mxu0 %v498
        %v579 = vpop.f32.mrb[0].mxu0
        %v580 = vadd.f32 0.0, %v579
        %v581 = vpop.f32.mrb[0].mxu0
        %582 = vmatprep.mubr.f32.mxu0 0.0
        %583 = vmatmul.mubr.f32.gmra.mrb[0].mxu0 %v501
        %v584 = vpop.f32.mrb[0].mxu0
        %v585 = vadd.f32 0.0, %v584
        %v586 = vpop.f32.mrb[0].mxu0
        %587 = vmatprep.mubr.f32.mxu0 0.0
        %588 = vmatmul.mubr.f32.gmra.mrb[0].mxu0 %v504
        %v589 = vpop.f32.mrb[0].mxu0
        %v590 = vadd.f32 0.0, %v589
        %v591 = vpop.f32.mrb[0].mxu0
        %592 = vmatprep.mubr.f32.mxu0 0.0
        %593 = vmatmul.mubr.f32.gmra.mrb[0].mxu0 %v507
        %v594 = vpop.f32.mrb[0].mxu0
        %v595 = vadd.f32 0.0, %v594
        %v596 = vpop.f32.mrb[0].mxu0
        %597 = vdwg.mxu0
        %v598 = vsub.f32 0.0, %v580
        %v599 = vsub.f32 0.0, %v585
        %v600 = vsub.f32 0.0, %v590
        %v601 = vsub.f32 0.0, %v595
        %v602 = vmul.f32 %v598, 1.442695
        %v603 = vpow.pop %v602
        %v604 = vmul.f32 %v599, 1.442695
        %v605 = vpow.pop %v604
        %v606 = vmul.f32 %v600, 1.442695
        %v607 = vpow.pop %v606
        %v608 = vmul.f32 %v601, 1.442695
        %v609 = vpow.pop %v608
        %v610 = vadd.f32 %v603, 1.0
        %v611 = vadd.f32 %v605, 1.0
        %v612 = vadd.f32 %v607, 1.0
        %v613 = vadd.f32 %v609, 1.0
        %v614 = vrcp.pop %v610
        %v615 = vmul.f32 1.0, %v614
        %v616 = vrcp.pop %v611
        %v617 = vmul.f32 1.0, %v616
        %v618 = vrcp.pop %v612
        %v619 = vmul.f32 1.0, %v618
        %v620 = vrcp.pop %v613
        %v621 = vmul.f32 1.0, %v620
        %622 = vrot.lane.b32.xlu0 %v495, 112
        %v623 = vpop.permute.xlu0 %622
        %v625 = vsel %vm496, %v417, 0
        %v628 = vsel %vm496, %v418, 0
        %v631 = vsel %vm496, %v419, 0
        %v634 = vsel %vm496, %v420, 0
        %v636 = vsel %vm509, %v623, 0
        %638 = vmatprep.subr.mxu0 0.0
        %639 = vmatpush1.msra.mxu0 %v636
        %640 = vmatprep.subr.mxu0 0.0
        %641 = vmatpush1.msra.mxu0 0.0
        %642 = vmatprep.subr.mxu0 0.0
        %643 = vmatpush1.msra.mxu0 0.0
        %644 = vmatprep.subr.mxu0 0.0
        %645 = vmatpush1.msra.mxu0 0.0
        %646 = vmatprep.subr.mxu0 0.0
        %647 = vmatpush1.msra.mxu0 0.0
        %648 = vmatprep.subr.mxu0 0.0
        %649 = vmatpush1.msra.mxu0 0.0
        %650 = vmatprep.subr.mxu0 0.0
        %651 = vmatpush1.msra.mxu0 0.0
        %652 = vmatprep.subr.mxu0 0.0
        %653 = vmatpush1.msra.mxu0 0.0
        %654 = vmatprep.subr.mxu0 0.0
        %655 = vmatpush1.msra.mxu0 0.0
        %656 = vmatprep.subr.mxu0 0.0
        %657 = vmatpush1.msra.mxu0 0.0
        %658 = vmatprep.subr.mxu0 0.0
        %659 = vmatpush1.msra.mxu0 0.0
        %660 = vmatprep.subr.mxu0 0.0
        %661 = vmatpush1.msra.mxu0 0.0
        %662 = vmatprep.subr.mxu0 0.0
        %663 = vmatpush1.msra.mxu0 0.0
        %664 = vmatprep.subr.mxu0 0.0
        %665 = vmatpush1.msra.mxu0 0.0
        %666 = vmatprep.subr.mxu0 0.0
        %667 = vmatpush1.msra.mxu0 0.0
        %668 = vmatprep.subr.mxu0 0.0
        %669 = vmatpush1.msra.mxu0 0.0
        %670 = vmatprep.subr.mxu0 0.0
        %671 = vmatpush1.msra.mxu0 0.0
        %672 = vmatprep.subr.mxu0 0.0
        %673 = vmatpush1.msra.mxu0 0.0
        %674 = vmatprep.subr.mxu0 0.0
        %675 = vmatpush1.msra.mxu0 0.0
        %676 = vmatprep.subr.mxu0 0.0
        %677 = vmatpush1.msra.mxu0 0.0
        %678 = vmatprep.subr.mxu0 0.0
        %679 = vmatpush1.msra.mxu0 0.0
        %680 = vmatprep.subr.mxu0 0.0
        %681 = vmatpush1.msra.mxu0 0.0
        %682 = vmatprep.subr.mxu0 0.0
        %683 = vmatpush1.msra.mxu0 0.0
        %684 = vmatprep.subr.mxu0 0.0
        %685 = vmatpush1.msra.mxu0 0.0
        %686 = vmatprep.subr.mxu0 0.0
        %687 = vmatpush1.msra.mxu0 0.0
        %688 = vmatprep.subr.mxu0 0.0
        %689 = vmatpush1.msra.mxu0 0.0
        %690 = vmatprep.subr.mxu0 0.0
        %691 = vmatpush1.msra.mxu0 0.0
        %692 = vmatprep.subr.mxu0 0.0
        %693 = vmatpush1.msra.mxu0 0.0
        %694 = vmatprep.subr.mxu0 0.0
        %695 = vmatpush1.msra.mxu0 0.0
        %696 = vmatprep.subr.mxu0 0.0
        %697 = vmatpush1.msra.mxu0 0.0
        %698 = vmatprep.subr.mxu0 0.0
        %699 = vmatpush1.msra.mxu0 0.0
        %700 = vmatprep.subr.mxu0 0.0
        %701 = vmatpush1.msra.mxu0 0.0
        %702 = vmatprep.mubr.f32.mxu0 0.0
        %703 = vmatmul.mubr.f32.gmra.mrb[0].mxu0 %v625
        %v704 = vpop.f32.mrb[0].mxu0
        %v705 = vadd.f32 0.0, %v704
        %v706 = vpop.f32.mrb[0].mxu0
        %707 = vmatprep.mubr.f32.mxu0 0.0
        %708 = vmatmul.mubr.f32.gmra.mrb[0].mxu0 %v628
        %v709 = vpop.f32.mrb[0].mxu0
        %v710 = vadd.f32 0.0, %v709
        %v711 = vpop.f32.mrb[0].mxu0
        %712 = vmatprep.mubr.f32.mxu0 0.0
        %713 = vmatmul.mubr.f32.gmra.mrb[0].mxu0 %v631
        %v714 = vpop.f32.mrb[0].mxu0
        %v715 = vadd.f32 0.0, %v714
        %v716 = vpop.f32.mrb[0].mxu0
        %717 = vmatprep.mubr.f32.mxu0 0.0
        %718 = vmatmul.mubr.f32.gmra.mrb[0].mxu0 %v634
        %v719 = vpop.f32.mrb[0].mxu0
        %v720 = vadd.f32 0.0, %v719
        %v721 = vpop.f32.mrb[0].mxu0
        %722 = vdwg.mxu0
        %v723 = vsub.f32 0.0, %v705
        %v724 = vsub.f32 0.0, %v710
        %v725 = vsub.f32 0.0, %v715
        %v726 = vsub.f32 0.0, %v720
        %v727 = vmul.f32 %v723, 1.442695
        %v728 = vpow.pop %v727
        %v729 = vmul.f32 %v724, 1.442695
        %v730 = vpow.pop %v729
        %v731 = vmul.f32 %v725, 1.442695
        %v732 = vpow.pop %v731
        %v733 = vmul.f32 %v726, 1.442695
        %v734 = vpow.pop %v733
        %v735 = vadd.f32 %v728, 1.0
        %v736 = vadd.f32 %v730, 1.0
        %v737 = vadd.f32 %v732, 1.0
        %v738 = vadd.f32 %v734, 1.0
        %v739 = vrcp.pop %v735
        %v740 = vmul.f32 1.0, %v739
        %v741 = vrcp.pop %v736
        %v742 = vmul.f32 1.0, %v741
        %v743 = vrcp.pop %v737
        %v744 = vmul.f32 1.0, %v743
        %v745 = vrcp.pop %v738
        %v746 = vmul.f32 1.0, %v745
        %v747 = vld [vmem:[%s2] sm:$0xff]
        %v748 = vld [vmem:[%s2 + $0x8] sm:$0xff]
        %v749 = vld [vmem:[%s2 + $0x10] sm:$0xff]
        %v750 = vld [vmem:[%s2 + $0x18] sm:$0xff]
        %vm751 = vcmask 130048
        %v753 = vsel %vm751, %v615, 0
        %v756 = vsel %vm751, %v617, 0
        %v759 = vsel %vm751, %v619, 0
        %v762 = vsel %vm751, %v621, 0
        %764 = vmatprep.subr.mxu0 %v748
        %765 = vmatpush1.msra.mxu0 %v747
        %766 = vmatprep.subr.mxu0 %v750
        %767 = vmatpush1.msra.mxu0 %v749
        %768 = vmatprep.subr.mxu0 0.0
        %769 = vmatpush1.msra.mxu0 0.0
        %770 = vmatprep.subr.mxu0 0.0
        %771 = vmatpush1.msra.mxu0 0.0
        %772 = vmatprep.subr.mxu0 0.0
        %773 = vmatpush1.msra.mxu0 0.0
        %774 = vmatprep.subr.mxu0 0.0
        %775 = vmatpush1.msra.mxu0 0.0
        %776 = vmatprep.subr.mxu0 0.0
        %777 = vmatpush1.msra.mxu0 0.0
        %778 = vmatprep.subr.mxu0 0.0
        %779 = vmatpush1.msra.mxu0 0.0
        %780 = vmatprep.subr.mxu0 0.0
        %781 = vmatpush1.msra.mxu0 0.0
        %782 = vmatprep.subr.mxu0 0.0
        %783 = vmatpush1.msra.mxu0 0.0
        %784 = vmatprep.subr.mxu0 0.0
        %785 = vmatpush1.msra.mxu0 0.0
        %786 = vmatprep.subr.mxu0 0.0
        %787 = vmatpush1.msra.mxu0 0.0
        %788 = vmatprep.subr.mxu0 0.0
        %789 = vmatpush1.msra.mxu0 0.0
        %790 = vmatprep.subr.mxu0 0.0
        %791 = vmatpush1.msra.mxu0 0.0
        %792 = vmatprep.subr.mxu0 0.0
        %793 = vmatpush1.msra.mxu0 0.0
        %794 = vmatprep.subr.mxu0 0.0
        %795 = vmatpush1.msra.mxu0 0.0
        %796 = vmatprep.subr.mxu0 0.0
        %797 = vmatpush1.msra.mxu0 0.0
        %798 = vmatprep.subr.mxu0 0.0
        %799 = vmatpush1.msra.mxu0 0.0
        %800 = vmatprep.subr.mxu0 0.0
        %801 = vmatpush1.msra.mxu0 0.0
        %802 = vmatprep.subr.mxu0 0.0
        %803 = vmatpush1.msra.mxu0 0.0
        %804 = vmatprep.subr.mxu0 0.0
        %805 = vmatpush1.msra.mxu0 0.0
        %806 = vmatprep.subr.mxu0 0.0
        %807 = vmatpush1.msra.mxu0 0.0
        %808 = vmatprep.subr.mxu0 0.0
        %809 = vmatpush1.msra.mxu0 0.0
        %810 = vmatprep.subr.mxu0 0.0
        %811 = vmatpush1.msra.mxu0 0.0
        %812 = vmatprep.subr.mxu0 0.0
        %813 = vmatpush1.msra.mxu0 0.0
        %814 = vmatprep.subr.mxu0 0.0
        %815 = vmatpush1.msra.mxu0 0.0
        %816 = vmatprep.subr.mxu0 0.0
        %817 = vmatpush1.msra.mxu0 0.0
        %818 = vmatprep.subr.mxu0 0.0
        %819 = vmatpush1.msra.mxu0 0.0
        %820 = vmatprep.subr.mxu0 0.0
        %821 = vmatpush1.msra.mxu0 0.0
        %822 = vmatprep.subr.mxu0 0.0
        %823 = vmatpush1.msra.mxu0 0.0
        %824 = vmatprep.subr.mxu0 0.0
        %825 = vmatpush1.msra.mxu0 0.0
        %826 = vmatprep.subr.mxu0 0.0
        %827 = vmatpush1.msra.mxu0 0.0
        %828 = vmatprep.mubr.f32.mxu0 0.0
        %829 = vmatmul.mubr.f32.gmra.mrb[0].mxu0 %v753
        %v830 = vpop.f32.mrb[0].mxu0
        %v831 = vadd.f32 0.0, %v830
        %v832 = vpop.f32.mrb[0].mxu0
        %v833 = vadd.f32 0.0, %v832
        %834 = vmatprep.mubr.f32.mxu0 0.0
        %835 = vmatmul.mubr.f32.gmra.mrb[0].mxu0 %v756
        %v836 = vpop.f32.mrb[0].mxu0
        %v837 = vadd.f32 0.0, %v836
        %v838 = vpop.f32.mrb[0].mxu0
        %v839 = vadd.f32 0.0, %v838
        %840 = vmatprep.mubr.f32.mxu0 0.0
        %841 = vmatmul.mubr.f32.gmra.mrb[0].mxu0 %v759
        %v842 = vpop.f32.mrb[0].mxu0
        %v843 = vadd.f32 0.0, %v842
        %v844 = vpop.f32.mrb[0].mxu0
        %v845 = vadd.f32 0.0, %v844
        %846 = vmatprep.mubr.f32.mxu0 0.0
        %847 = vmatmul.mubr.f32.gmra.mrb[0].mxu0 %v762
        %v848 = vpop.f32.mrb[0].mxu0
        %v849 = vadd.f32 0.0, %v848
        %v850 = vpop.f32.mrb[0].mxu0
        %v851 = vadd.f32 0.0, %v850
        %852 = vdwg.mxu0
        %v853 = vld [vmem:[%s3] sm:$0xff]
        %v854 = vld [vmem:[%s3 + $0x8] sm:$0xff]
        %v855 = vld [vmem:[%s3 + $0x10] sm:$0xff]
        %v856 = vld [vmem:[%s3 + $0x18] sm:$0xff]
        %v858 = vsel %vm751, %v740, 0
        %v861 = vsel %vm751, %v742, 0
        %v864 = vsel %vm751, %v744, 0
        %v867 = vsel %vm751, %v746, 0
        %869 = vmatprep.subr.mxu0 %v854
        %870 = vmatpush1.msra.mxu0 %v853
        %871 = vmatprep.subr.mxu0 %v856
        %872 = vmatpush1.msra.mxu0 %v855
        %873 = vmatprep.subr.mxu0 0.0
        %874 = vmatpush1.msra.mxu0 0.0
        %875 = vmatprep.subr.mxu0 0.0
        %876 = vmatpush1.msra.mxu0 0.0
        %877 = vmatprep.subr.mxu0 0.0
        %878 = vmatpush1.msra.mxu0 0.0
        %879 = vmatprep.subr.mxu0 0.0
        %880 = vmatpush1.msra.mxu0 0.0
        %881 = vmatprep.subr.mxu0 0.0
        %882 = vmatpush1.msra.mxu0 0.0
        %883 = vmatprep.subr.mxu0 0.0
        %884 = vmatpush1.msra.mxu0 0.0
        %885 = vmatprep.subr.mxu0 0.0
        %886 = vmatpush1.msra.mxu0 0.0
        %887 = vmatprep.subr.mxu0 0.0
        %888 = vmatpush1.msra.mxu0 0.0
        %889 = vmatprep.subr.mxu0 0.0
        %890 = vmatpush1.msra.mxu0 0.0
        %891 = vmatprep.subr.mxu0 0.0
        %892 = vmatpush1.msra.mxu0 0.0
        %893 = vmatprep.subr.mxu0 0.0
        %894 = vmatpush1.msra.mxu0 0.0
        %895 = vmatprep.subr.mxu0 0.0
        %896 = vmatpush1.msra.mxu0 0.0
        %897 = vmatprep.subr.mxu0 0.0
        %898 = vmatpush1.msra.mxu0 0.0
        %899 = vmatprep.subr.mxu0 0.0
        %900 = vmatpush1.msra.mxu0 0.0
        %901 = vmatprep.subr.mxu0 0.0
        %902 = vmatpush1.msra.mxu0 0.0
        %903 = vmatprep.subr.mxu0 0.0
        %904 = vmatpush1.msra.mxu0 0.0
        %905 = vmatprep.subr.mxu0 0.0
        %906 = vmatpush1.msra.mxu0 0.0
        %907 = vmatprep.subr.mxu0 0.0
        %908 = vmatpush1.msra.mxu0 0.0
        %909 = vmatprep.subr.mxu0 0.0
        %910 = vmatpush1.msra.mxu0 0.0
        %911 = vmatprep.subr.mxu0 0.0
        %912 = vmatpush1.msra.mxu0 0.0
        %913 = vmatprep.subr.mxu0 0.0
        %914 = vmatpush1.msra.mxu0 0.0
        %915 = vmatprep.subr.mxu0 0.0
        %916 = vmatpush1.msra.mxu0 0.0
        %917 = vmatprep.subr.mxu0 0.0
        %918 = vmatpush1.msra.mxu0 0.0
        %919 = vmatprep.subr.mxu0 0.0
        %920 = vmatpush1.msra.mxu0 0.0
        %921 = vmatprep.subr.mxu0 0.0
        %922 = vmatpush1.msra.mxu0 0.0
        %923 = vmatprep.subr.mxu0 0.0
        %924 = vmatpush1.msra.mxu0 0.0
        %925 = vmatprep.subr.mxu0 0.0
        %926 = vmatpush1.msra.mxu0 0.0
        %927 = vmatprep.subr.mxu0 0.0
        %928 = vmatpush1.msra.mxu0 0.0
        %929 = vmatprep.subr.mxu0 0.0
        %930 = vmatpush1.msra.mxu0 0.0
        %931 = vmatprep.subr.mxu0 0.0
        %932 = vmatpush1.msra.mxu0 0.0
        %933 = vmatprep.mubr.f32.mxu0 0.0
        %934 = vmatmul.mubr.f32.gmra.mrb[0].mxu0 %v858
        %v935 = vpop.f32.mrb[0].mxu0
        %v936 = vadd.f32 0.0, %v935
        %v937 = vpop.f32.mrb[0].mxu0
        %v938 = vadd.f32 0.0, %v937
        %939 = vmatprep.mubr.f32.mxu0 0.0
        %940 = vmatmul.mubr.f32.gmra.mrb[0].mxu0 %v861
        %v941 = vpop.f32.mrb[0].mxu0
        %v942 = vadd.f32 0.0, %v941
        %v943 = vpop.f32.mrb[0].mxu0
        %v944 = vadd.f32 0.0, %v943
        %945 = vmatprep.mubr.f32.mxu0 0.0
        %946 = vmatmul.mubr.f32.gmra.mrb[0].mxu0 %v864
        %v947 = vpop.f32.mrb[0].mxu0
        %v948 = vadd.f32 0.0, %v947
        %v949 = vpop.f32.mrb[0].mxu0
        %v950 = vadd.f32 0.0, %v949
        %951 = vmatprep.mubr.f32.mxu0 0.0
        %952 = vmatmul.mubr.f32.gmra.mrb[0].mxu0 %v867
        %v953 = vpop.f32.mrb[0].mxu0
        %v954 = vadd.f32 0.0, %v953
        %v955 = vpop.f32.mrb[0].mxu0
        %v956 = vadd.f32 0.0, %v955
        %957 = vdwg.mxu0
        %v958 = vmul.f32 %v831, %v936
        %v959 = vmul.f32 %v833, %v938
        %v960 = vmul.f32 %v837, %v942
        %v961 = vmul.f32 %v839, %v944
        %v962 = vmul.f32 %v843, %v948
        %v963 = vmul.f32 %v845, %v950
        %v964 = vmul.f32 %v849, %v954
        %v965 = vmul.f32 %v851, %v956
        %v966 = vmul.f32 %v283, %v958
        %v967 = vmul.f32 %v284, %v959
        %v968 = vmul.f32 %v285, %v960
        %v969 = vmul.f32 %v286, %v961
        %v970 = vmul.f32 %v287, %v962
        %v971 = vmul.f32 %v288, %v963
        %v972 = vmul.f32 %v289, %v964
        %v973 = vmul.f32 %v290, %v965
        %974 = vst [vmem:[%s274] sm:$0xff] %v966
        %975 = vst [vmem:[%s274 + $0x8] sm:$0xff] %v967
        %976 = vst [vmem:[%s274 + $0x10] sm:$0xff] %v968
        %977 = vst [vmem:[%s274 + $0x18] sm:$0xff] %v969
        %978 = vst [vmem:[%s274 + $0x20] sm:$0xff] %v970
        %979 = vst [vmem:[%s274 + $0x28] sm:$0xff] %v971
        %980 = vst [vmem:[%s274 + $0x30] sm:$0xff] %v972
        %981 = vst [vmem:[%s274 + $0x38] sm:$0xff] %v973
        %s982 = sand.u32 %s181, 1
        %s983 = scalar_lea.sflag [#allocation3], %s982
        %s984 = sand.u32 %s181, 1
        %s985 = smul.addr %s984, 64
        %s986 = scalar_lea.vmem [#allocation2], %s985
        // Predicated region
        $region49: #{tpu_custom_call.1} parent=47 // pred_check
          %p987 = pneg %p191
        $region50: #{tpu_custom_call.1} parent=47 // pred_check_branch
          %989 = sbr.rel (%p987) target = $region52
        $region51: #{tpu_custom_call.1} parent=47 // pred_region
          %s990 = smul.u32 4, %s21
          %s992 = ssub.s32 1024, 1024
          %993 = vsyncadd %s983, %s992
          %s994 = smul.addr %s990, 2
          %s995 = smul.addr %s994, 128
          %s996 = scalar_lea.hbm %s7, %s995
          %s997 = sshll.u32 %s986, 4
          %s998 = int_to_ptr.vmem [resolvable:$true] %s997
          %1003 = dma.vmem_to_hbm [thread:$0]  %s998, 1024, %s996, %s983, 256, 256, 16
        $region52: #{tpu_custom_call.1} parent=47 // pred_fallthru
          _
      $region48: #{tpu_custom_call.1} parent=5 // pred_fallthru
        _
      %p1004 = scmp.le.s32.totalorder 2, %s16
      // Predicated region
      $region53: #{tpu_custom_call.1} parent=5 // pred_check
        %p1005 = pneg %p1004
      $region54: #{tpu_custom_call.1} parent=5 // pred_check_branch
        %1007 = sbr.rel (%p1005) target = $region56
      $region55: #{tpu_custom_call.1} parent=5 // pred_region
        %s1008 = ssub.s32 %s16, 2
        // Predicated region
        $region57: #{tpu_custom_call.1} parent=55 // pred_check
          %p1009 = pneg %p197
        $region58: #{tpu_custom_call.1} parent=55 // pred_check_branch
          %1011 = sbr.rel (%p1009) target = $region60
        $region59: #{tpu_custom_call.1} parent=55 // pred_region
          %s1012 = sand.u32 %s182, 1
          %s1013 = scalar_lea.sflag [#allocation3], %s1012
          %s1014 = sand.u32 %s182, 1
          %s1015 = smul.addr %s1014, 64
          %s1016 = scalar_lea.vmem [#allocation2], %s1015
          %1017 = dma.done %s1013, 1024
        $region60: #{tpu_custom_call.1} parent=55 // pred_fallthru
          _
      $region56: #{tpu_custom_call.1} parent=5 // pred_fallthru
        _
    $region6: #{tpu_custom_call.1} parent=1 // loop_footer
      %s20 = sadd.s32 1, %s16
    $region7: #{tpu_custom_call.1} parent=1 // loop_footer_branch
      %15 = sbr.rel target = $region3
    $region8: #{tpu_custom_call.1} parent=1 // loop_exit
      _
    %1018 = vsyncpa [#allocation3], 1
    %s1019 = scalar_lea.sflag [#allocation3], 1
    %1020 = vsyncpa %s1019, 1

// kernel: tpu_custom_call.1
$region0: #{tpu_custom_call.1}
  #allocation0 [shape = 'u32[]', space=smem, size = 0x4, offset = 0x4, fixed_abs, tag = 'smem constant byte address 0x4 - core index']
  #allocation1 [shape = 'u32[144,128]{1,0:T(1,128)}', space=vmem, size = 0x12000, scoped, tag = 'internal scratch']
  %s0 = inlined_call_operand.vmem [shape: f32[64,256], index: 0, kind: input, shape index: {}]
  %s1 = inlined_call_operand.vmem [shape: f32[256,32], index: 1, kind: input, shape index: {}]
  %s2 = inlined_call_operand.vmem [shape: f32[16,256], index: 2, kind: input, shape index: {}]
  %s3 = inlined_call_operand.vmem [shape: f32[16,256], index: 3, kind: input, shape index: {}]
  %s4 = inlined_call_operand.vmem [shape: f32[2,32], index: 4, kind: input, shape index: {}]
  %s5 = inlined_call_operand.vmem [shape: f32[32,2], index: 5, kind: input, shape index: {}]
  %s6 = inlined_call_operand.vmem [shape: f32[32,2], index: 6, kind: input, shape index: {}]
  %s7 = inlined_call_operand.hbm [shape: f32[64,256], index: 7, kind: output, shape index: {}]
  %s8 = sld [smem:[#allocation0]]
  $region61: #{tpu_custom_call.1} parent=0
    _
  %s10 = ssub.s32 1, %s8
  %s11 = scalar_select 0, %s10, %s8
  $region1: #{tpu_custom_call.1} parent=0
    #allocation2 [shape = 'u8[65536]{0}', space=vmem, size = 0x10000, scoped, tag = 'output window, operand 0']
    #allocation3 [shape = 's32[2]{0}', space=sflag, size = 0x8, scoped, tag = 'scoped memory for tpu_custom_call.1']
    %12 = vsyncpa [#allocation3], 0
    %s13 = scalar_lea.sflag [#allocation3], 1
    %14 = vsyncpa %s13, 0
    loop: start=0, step=1, limit=4
    $region2: #{tpu_custom_call.1} parent=1 // loop_pre_header
      _
    $region3: #{tpu_custom_call.1} parent=1 // loop_header
      %s16 = sphi 0, %s20
      %p17 = scmp.ge.s32.totalorder %s16, 4
      %s26 = sphi 0, %s28
      %s29 = sphi 0, %s26
      %s30 = sphi 0, %s29
      %s46 = sphi 0, %s30
      %s50 = sphi 0, %s50
      %s52 = sphi 0, %s50
      %s53 = sphi 0, %s52
      %s67 = sphi 0, %s53
      %s71 = sphi 0, %s71
      %s73 = sphi 0, %s71
      %s74 = sphi 0, %s73
      %s88 = sphi 0, %s74
      %s92 = sphi 0, %s92
      %s94 = sphi 0, %s92
      %s95 = sphi 0, %s94
      %s109 = sphi 0, %s95
      %s113 = sphi 0, %s113
      %s115 = sphi 0, %s113
      %s116 = sphi 0, %s115
      %s130 = sphi 0, %s116
      %s134 = sphi 0, %s134
      %s136 = sphi 0, %s134
      %s137 = sphi 0, %s136
      %s151 = sphi 0, %s137
      %s155 = sphi 0, %s155
      %s157 = sphi 0, %s155
      %s158 = sphi 0, %s157
      %s172 = sphi 0, %s158
      %s178 = sphi 0, %s180
      %s181 = sphi 0, %s178
      %s182 = sphi 0, %s181
      %s198 = sphi 0, %s182
    $region4: #{tpu_custom_call.1} parent=1 // loop_header_branch
      %19 = sbr.rel (%p17) target = $region8
    $region5: #{tpu_custom_call.1} parent=1 // loop_body
      %s21 = ssub.s32 %s16, 1
      %s22 = ssub.s32 %s16, 2
      %s23 = sadd.s32 %s16, 1
      %s24 = ssub.s32 %s16, %s23
      %p25 = scmp.eq.s32.totalorder %s24, 0
      %s27 = sadd.s32 %s26, 1
      %s28 = scalar_select %p25, %s26, %s27
      %p31 = pneg %p25
      %p32 = scmp.eq.s32.totalorder %s16, 1
      %p33 = por %p31, %p32
      %p34 = scmp.ne.s32.totalorder %s26, %s29
      %p35 = scmp.eq.s32.totalorder %s16, 0
      %p36 = por %p34, %p35
      %p37 = scmp.ne.s32.totalorder %s26, %s29
      %p38 = scmp.eq.s32.totalorder %s21, 1
      %p39 = por %p37, %p38
      %p40 = scmp.ne.s32.totalorder %s29, %s30
      %p41 = scmp.eq.s32.totalorder %s21, 0
      %p42 = por %p40, %p41
      %p43 = scmp.ne.s32.totalorder %s29, %s30
      %p44 = scmp.eq.s32.totalorder %s22, 1
      %p45 = por %p43, %p44
      %p47 = scmp.ne.s32.totalorder %s30, %s46
      %p48 = scmp.eq.s32.totalorder %s22, 0
      %p49 = por %p47, %p48
      %s51 = sadd.s32 %s50, 1
      %p54 = scmp.eq.s32.totalorder %s16, 1
      %p55 = scmp.ne.s32.totalorder %s50, %s52
      %p56 = scmp.eq.s32.totalorder %s16, 0
      %p57 = por %p55, %p56
      %p58 = scmp.ne.s32.totalorder %s50, %s52
      %p59 = scmp.eq.s32.totalorder %s21, 1
      %p60 = por %p58, %p59
      %p61 = scmp.ne.s32.totalorder %s52, %s53
      %p62 = scmp.eq.s32.totalorder %s21, 0
      %p63 = por %p61, %p62
      %p64 = scmp.ne.s32.totalorder %s52, %s53
      %p65 = scmp.eq.s32.totalorder %s22, 1
      %p66 = por %p64, %p65
      %p68 = scmp.ne.s32.totalorder %s53, %s67
      %p69 = scmp.eq.s32.totalorder %s22, 0
      %p70 = por %p68, %p69
      %s72 = sadd.s32 %s71, 1
      %p75 = scmp.eq.s32.totalorder %s16, 1
      %p76 = scmp.ne.s32.totalorder %s71, %s73
      %p77 = scmp.eq.s32.totalorder %s16, 0
      %p78 = por %p76, %p77
      %p79 = scmp.ne.s32.totalorder %s71, %s73
      %p80 = scmp.eq.s32.totalorder %s21, 1
      %p81 = por %p79, %p80
      %p82 = scmp.ne.s32.totalorder %s73, %s74
      %p83 = scmp.eq.s32.totalorder %s21, 0
      %p84 = por %p82, %p83
      %p85 = scmp.ne.s32.totalorder %s73, %s74
      %p86 = scmp.eq.s32.totalorder %s22, 1
      %p87 = por %p85, %p86
      %p89 = scmp.ne.s32.totalorder %s74, %s88
      %p90 = scmp.eq.s32.totalorder %s22, 0
      %p91 = por %p89, %p90
      %s93 = sadd.s32 %s92, 1
      %p96 = scmp.eq.s32.totalorder %s16, 1
      %p97 = scmp.ne.s32.totalorder %s92, %s94
      %p98 = scmp.eq.s32.totalorder %s16, 0
      %p99 = por %p97, %p98
      %p100 = scmp.ne.s32.totalorder %s92, %s94
      %p101 = scmp.eq.s32.totalorder %s21, 1
      %p102 = por %p100, %p101
      %p103 = scmp.ne.s32.totalorder %s94, %s95
      %p104 = scmp.eq.s32.totalorder %s21, 0
      %p105 = por %p103, %p104
      %p106 = scmp.ne.s32.totalorder %s94, %s95
      %p107 = scmp.eq.s32.totalorder %s22, 1
      %p108 = por %p106, %p107
      %p110 = scmp.ne.s32.totalorder %s95, %s109
      %p111 = scmp.eq.s32.totalorder %s22, 0
      %p112 = por %p110, %p111
      %s114 = sadd.s32 %s113, 1
      %p117 = scmp.eq.s32.totalorder %s16, 1
      %p118 = scmp.ne.s32.totalorder %s113, %s115
      %p119 = scmp.eq.s32.totalorder %s16, 0
      %p120 = por %p118, %p119
      %p121 = scmp.ne.s32.totalorder %s113, %s115
      %p122 = scmp.eq.s32.totalorder %s21, 1
      %p123 = por %p121, %p122
      %p124 = scmp.ne.s32.totalorder %s115, %s116
      %p125 = scmp.eq.s32.totalorder %s21, 0
      %p126 = por %p124, %p125
      %p127 = scmp.ne.s32.totalorder %s115, %s116
      %p128 = scmp.eq.s32.totalorder %s22, 1
      %p129 = por %p127, %p128
      %p131 = scmp.ne.s32.totalorder %s116, %s130
      %p132 = scmp.eq.s32.totalorder %s22, 0
      %p133 = por %p131, %p132
      %s135 = sadd.s32 %s134, 1
      %p138 = scmp.eq.s32.totalorder %s16, 1
      %p139 = scmp.ne.s32.totalorder %s134, %s136
      %p140 = scmp.eq.s32.totalorder %s16, 0
      %p141 = por %p139, %p140
      %p142 = scmp.ne.s32.totalorder %s134, %s136
      %p143 = scmp.eq.s32.totalorder %s21, 1
      %p144 = por %p142, %p143
      %p145 = scmp.ne.s32.totalorder %s136, %s137
      %p146 = scmp.eq.s32.totalorder %s21, 0
      %p147 = por %p145, %p146
      %p148 = scmp.ne.s32.totalorder %s136, %s137
      %p149 = scmp.eq.s32.totalorder %s22, 1
      %p150 = por %p148, %p149
      %p152 = scmp.ne.s32.totalorder %s137, %s151
      %p153 = scmp.eq.s32.totalorder %s22, 0
      %p154 = por %p152, %p153
      %s156 = sadd.s32 %s155, 1
      %p159 = scmp.eq.s32.totalorder %s16, 1
      %p160 = scmp.ne.s32.totalorder %s155, %s157
      %p161 = scmp.eq.s32.totalorder %s16, 0
      %p162 = por %p160, %p161
      %p163 = scmp.ne.s32.totalorder %s155, %s157
      %p164 = scmp.eq.s32.totalorder %s21, 1
      %p165 = por %p163, %p164
      %p166 = scmp.ne.s32.totalorder %s157, %s158
      %p167 = scmp.eq.s32.totalorder %s21, 0
      %p168 = por %p166, %p167
      %p169 = scmp.ne.s32.totalorder %s157, %s158
      %p170 = scmp.eq.s32.totalorder %s22, 1
      %p171 = por %p169, %p170
      %p173 = scmp.ne.s32.totalorder %s158, %s172
      %p174 = scmp.eq.s32.totalorder %s22, 0
      %p175 = por %p173, %p174
      %s176 = ssub.s32 %s16, %s23
      %p177 = scmp.eq.s32.totalorder %s176, 0
      %s179 = sadd.s32 %s178, 1
      %s180 = scalar_select %p177, %s178, %s179
      %p183 = pneg %p177
      %p184 = scmp.eq.s32.totalorder %s16, 1
      %p185 = por %p183, %p184
      %p186 = scmp.ne.s32.totalorder %s178, %s181
      %p187 = scmp.eq.s32.totalorder %s16, 0
      %p188 = por %p186, %p187
      %p189 = scmp.ne.s32.totalorder %s178, %s181
      %p190 = scmp.eq.s32.totalorder %s21, 1
      %p191 = por %p189, %p190
      %p192 = scmp.ne.s32.totalorder %s181, %s182
      %p193 = scmp.eq.s32.totalorder %s21, 0
      %p194 = por %p192, %p193
      %p195 = scmp.ne.s32.totalorder %s181, %s182
      %p196 = scmp.eq.s32.totalorder %s22, 1
      %p197 = por %p195, %p196
      %p199 = scmp.ne.s32.totalorder %s182, %s198
      %p200 = scmp.eq.s32.totalorder %s22, 0
      %p201 = por %p199, %p200
      %p202 = scmp.le.s32.totalorder 1, %s16
      %p203 = scmp.lt.s32.totalorder %s16, 3
      %p204 = pnand %p202, %p203
      %p205 = pneg %p204
      // Predicated region
      $region9: #{tpu_custom_call.1} parent=5 // pred_check
        _
      $region10: #{tpu_custom_call.1} parent=5 // pred_check_branch
        %207 = sbr.rel (%p204) target = $region12
      $region11: #{tpu_custom_call.1} parent=5 // pred_region
        %s208 = ssub.s32 %s16, 1
        // Predicated region
        $region13: #{tpu_custom_call.1} parent=11 // pred_check
          %p209 = pneg %p63
        $region14: #{tpu_custom_call.1} parent=11 // pred_check_branch
          %211 = sbr.rel (%p209) target = $region16
        $region15: #{tpu_custom_call.1} parent=11 // pred_region
          _
        $region16: #{tpu_custom_call.1} parent=11 // pred_fallthru
          _
        // Predicated region
        $region17: #{tpu_custom_call.1} parent=11 // pred_check
          %p212 = pneg %p84
        $region18: #{tpu_custom_call.1} parent=11 // pred_check_branch
          %214 = sbr.rel (%p212) target = $region20
        $region19: #{tpu_custom_call.1} parent=11 // pred_region
          _
        $region20: #{tpu_custom_call.1} parent=11 // pred_fallthru
          _
        // Predicated region
        $region21: #{tpu_custom_call.1} parent=11 // pred_check
          %p215 = pneg %p105
        $region22: #{tpu_custom_call.1} parent=11 // pred_check_branch
          %217 = sbr.rel (%p215) target = $region24
        $region23: #{tpu_custom_call.1} parent=11 // pred_region
          _
        $region24: #{tpu_custom_call.1} parent=11 // pred_fallthru
          _
        // Predicated region
        $region25: #{tpu_custom_call.1} parent=11 // pred_check
          %p218 = pneg %p126
        $region26: #{tpu_custom_call.1} parent=11 // pred_check_branch
          %220 = sbr.rel (%p218) target = $region28
        $region27: #{tpu_custom_call.1} parent=11 // pred_region
          _
        $region28: #{tpu_custom_call.1} parent=11 // pred_fallthru
          _
        // Predicated region
        $region29: #{tpu_custom_call.1} parent=11 // pred_check
          %p221 = pneg %p147
        $region30: #{tpu_custom_call.1} parent=11 // pred_check_branch
          %223 = sbr.rel (%p221) target = $region32
        $region31: #{tpu_custom_call.1} parent=11 // pred_region
          _
        $region32: #{tpu_custom_call.1} parent=11 // pred_fallthru
          _
        // Predicated region
        $region33: #{tpu_custom_call.1} parent=11 // pred_check
          %p224 = pneg %p168
        $region34: #{tpu_custom_call.1} parent=11 // pred_check_branch
          %226 = sbr.rel (%p224) target = $region36
        $region35: #{tpu_custom_call.1} parent=11 // pred_region
          _
        $region36: #{tpu_custom_call.1} parent=11 // pred_fallthru
          _
      $region12: #{tpu_custom_call.1} parent=5 // pred_fallthru
        _
      %p227 = scmp.lt.s32.totalorder %s16, 2
      // Predicated region
      $region37: #{tpu_custom_call.1} parent=5 // pred_check
        %p228 = pneg %p227
      $region38: #{tpu_custom_call.1} parent=5 // pred_check_branch
        %230 = sbr.rel (%p228) target = $region40
      $region39: #{tpu_custom_call.1} parent=5 // pred_region
        // Predicated region
        $region41: #{tpu_custom_call.1} parent=39 // pred_check
          %p231 = pneg %p36
        $region42: #{tpu_custom_call.1} parent=39 // pred_check_branch
          %233 = sbr.rel (%p231) target = $region44
        $region43: #{tpu_custom_call.1} parent=39 // pred_region
          %s234 = smul.u32 4, %s16
          %p235 = scmp.lt.s32.totalorder %s234, 7
          %s236 = scalar_select %p235, %s234, 7
          %s237 = smul.addr %s236, 2
          %s238 = smul.addr %s237, 8
          %s239 = scalar_lea.vmem %s0, %s238
          %s240 = smul.u32 4, %s16
        $region44: #{tpu_custom_call.1} parent=39 // pred_fallthru
          _
      $region40: #{tpu_custom_call.1} parent=5 // pred_fallthru
        _
      %p241 = scmp.le.s32.totalorder 1, %s16
      %p242 = scmp.lt.s32.totalorder %s16, 3
      %p243 = pnand %p241, %p242
      %p244 = pneg %p243
      // Predicated region
      $region45: #{tpu_custom_call.1} parent=5 // pred_check
        _
      $region46: #{tpu_custom_call.1} parent=5 // pred_check_branch
        %246 = sbr.rel (%p243) target = $region48
      $region47: #{tpu_custom_call.1} parent=5 // pred_region
        %s247 = ssub.s32 %s16, 1
        %s248 = smul.u32 4, %s21
        %p249 = scmp.lt.s32.totalorder %s248, 7
        %s250 = scalar_select %p249, %s248, 7
        %s251 = smul.addr %s250, 2
        %s252 = smul.addr %s251, 8
        %s253 = scalar_lea.vmem %s0, %s252
        %p254 = pneg %p42
        %p255 = pneg %p39
        %p256 = pneg %p63
        %p257 = pneg %p60
        %p258 = pneg %p84
        %p259 = pneg %p81
        %p260 = pneg %p105
        %p261 = pneg %p102
        %p262 = pneg %p126
        %p263 = pneg %p123
        %p264 = pneg %p147
        %p265 = pneg %p144
        %p266 = pneg %p168
        %p267 = pneg %p165
        %p268 = pneg %p194
        %p269 = pneg %p191
        %s270 = sand.u32 %s181, 1
        %s271 = scalar_lea.sflag [#allocation3], %s270
        %s272 = sand.u32 %s181, 1
        %s273 = smul.addr %s272, 64
        %s274 = scalar_lea.vmem [#allocation2], %s273
        %s275 = smul.u32 4, %s21
        %p276 = scmp.lt.s32.totalorder %s275, 7
        %s277 = scalar_select %p276, %s275, 7
        %s278 = smul.addr %s277, 2
        %s279 = smul.addr %s278, 8
        %s280 = scalar_lea.vmem %s0, %s279
        %s281 = smul.u32 4, %s21
        %s282 = smul.u32 4, %s21
        %v283 = vld [vmem:[%s280] sm:$0xff]
        %v284 = vld [vmem:[%s280 + $0x8] sm:$0xff]
        %v285 = vld [vmem:[%s280 + $0x10] sm:$0xff]
        %v286 = vld [vmem:[%s280 + $0x18] sm:$0xff]
        %v287 = vld [vmem:[%s280 + $0x20] sm:$0xff]
        %v288 = vld [vmem:[%s280 + $0x28] sm:$0xff]
        %v289 = vld [vmem:[%s280 + $0x30] sm:$0xff]
        %v290 = vld [vmem:[%s280 + $0x38] sm:$0xff]
        %v291 = vld [vmem:[%s1] sm:$0xff]
        %v292 = vld [vmem:[%s1 + $0x8] sm:$0xff]
        %v293 = vld [vmem:[%s1 + $0x10] sm:$0xff]
        %v294 = vld [vmem:[%s1 + $0x18] sm:$0xff]
        %v295 = vld [vmem:[%s1 + $0x20] sm:$0xff]
        %v296 = vld [vmem:[%s1 + $0x28] sm:$0xff]
        %v297 = vld [vmem:[%s1 + $0x30] sm:$0xff]
        %v298 = vld [vmem:[%s1 + $0x38] sm:$0xff]
        %v299 = vld [vmem:[%s1 + $0x40] sm:$0xff]
        %v300 = vld [vmem:[%s1 + $0x48] sm:$0xff]
        %v301 = vld [vmem:[%s1 + $0x50] sm:$0xff]
        %v302 = vld [vmem:[%s1 + $0x58] sm:$0xff]
        %v303 = vld [vmem:[%s1 + $0x60] sm:$0xff]
        %v304 = vld [vmem:[%s1 + $0x68] sm:$0xff]
        %v305 = vld [vmem:[%s1 + $0x70] sm:$0xff]
        %v306 = vld [vmem:[%s1 + $0x78] sm:$0xff]
        %v307 = vld [vmem:[%s1 + $0x80] sm:$0xff]
        %v308 = vld [vmem:[%s1 + $0x88] sm:$0xff]
        %v309 = vld [vmem:[%s1 + $0x90] sm:$0xff]
        %v310 = vld [vmem:[%s1 + $0x98] sm:$0xff]
        %v311 = vld [vmem:[%s1 + $0xa0] sm:$0xff]
        %v312 = vld [vmem:[%s1 + $0xa8] sm:$0xff]
        %v313 = vld [vmem:[%s1 + $0xb0] sm:$0xff]
        %v314 = vld [vmem:[%s1 + $0xb8] sm:$0xff]
        %v315 = vld [vmem:[%s1 + $0xc0] sm:$0xff]
        %v316 = vld [vmem:[%s1 + $0xc8] sm:$0xff]
        %v317 = vld [vmem:[%s1 + $0xd0] sm:$0xff]
        %v318 = vld [vmem:[%s1 + $0xd8] sm:$0xff]
        %v319 = vld [vmem:[%s1 + $0xe0] sm:$0xff]
        %v320 = vld [vmem:[%s1 + $0xe8] sm:$0xff]
        %v321 = vld [vmem:[%s1 + $0xf0] sm:$0xff]
        %v322 = vld [vmem:[%s1 + $0xf8] sm:$0xff]
        %323 = vmatprep.subr.mxu0 0.0
        %324 = vmatpush1.msra.mxu0 %v291
        %325 = vmatprep.subr.mxu0 0.0
        %326 = vmatpush1.msra.mxu0 %v292
        %327 = vmatprep.subr.mxu0 0.0
        %328 = vmatpush1.msra.mxu0 %v293
        %329 = vmatprep.subr.mxu0 0.0
        %330 = vmatpush1.msra.mxu0 %v294
        %331 = vmatprep.subr.mxu0 0.0
        %332 = vmatpush1.msra.mxu0 %v295
        %333 = vmatprep.subr.mxu0 0.0
        %334 = vmatpush1.msra.mxu0 %v296
        %335 = vmatprep.subr.mxu0 0.0
        %336 = vmatpush1.msra.mxu0 %v297
        %337 = vmatprep.subr.mxu0 0.0
        %338 = vmatpush1.msra.mxu0 %v298
        %339 = vmatprep.subr.mxu0 0.0
        %340 = vmatpush1.msra.mxu0 %v299
        %341 = vmatprep.subr.mxu0 0.0
        %342 = vmatpush1.msra.mxu0 %v300
        %343 = vmatprep.subr.mxu0 0.0
        %344 = vmatpush1.msra.mxu0 %v301
        %345 = vmatprep.subr.mxu0 0.0
        %346 = vmatpush1.msra.mxu0 %v302
        %347 = vmatprep.subr.mxu0 0.0
        %348 = vmatpush1.msra.mxu0 %v303
        %349 = vmatprep.subr.mxu0 0.0
        %350 = vmatpush1.msra.mxu0 %v304
        %351 = vmatprep.subr.mxu0 0.0
        %352 = vmatpush1.msra.mxu0 %v305
        %353 = vmatprep.subr.mxu0 0.0
        %354 = vmatpush1.msra.mxu0 %v306
        %355 = vmatprep.subr.mxu0 0.0
        %356 = vmatpush1.msra.mxu0 %v307
        %357 = vmatprep.subr.mxu0 0.0
        %358 = vmatpush1.msra.mxu0 %v308
        %359 = vmatprep.subr.mxu0 0.0
        %360 = vmatpush1.msra.mxu0 %v309
        %361 = vmatprep.subr.mxu0 0.0
        %362 = vmatpush1.msra.mxu0 %v310
        %363 = vmatprep.subr.mxu0 0.0
        %364 = vmatpush1.msra.mxu0 %v311
        %365 = vmatprep.subr.mxu0 0.0
        %366 = vmatpush1.msra.mxu0 %v312
        %367 = vmatprep.subr.mxu0 0.0
        %368 = vmatpush1.msra.mxu0 %v313
        %369 = vmatprep.subr.mxu0 0.0
        %370 = vmatpush1.msra.mxu0 %v314
        %371 = vmatprep.subr.mxu0 0.0
        %372 = vmatpush1.msra.mxu0 %v315
        %373 = vmatprep.subr.mxu0 0.0
        %374 = vmatpush1.msra.mxu0 %v316
        %375 = vmatprep.subr.mxu0 0.0
        %376 = vmatpush1.msra.mxu0 %v317
        %377 = vmatprep.subr.mxu0 0.0
        %378 = vmatpush1.msra.mxu0 %v318
        %379 = vmatprep.subr.mxu0 0.0
        %380 = vmatpush1.msra.mxu0 %v319
        %381 = vmatprep.subr.mxu0 0.0
        %382 = vmatpush1.msra.mxu0 %v320
        %383 = vmatprep.subr.mxu0 0.0
        %384 = vmatpush1.msra.mxu0 %v321
        %385 = vmatprep.subr.mxu0 0.0
        %386 = vmatpush1.msra.mxu0 %v322
        %387 = vmatprep.mubr.f32.mxu0 %v284
        %388 = vmatmul.mubr.f32.gmra.mrb[0].mxu0 %v283
        %v389 = vpop.f32.mrb[0].mxu0
        %v390 = vadd.f32 0.0, %v389
        %v391 = vpop.f32.mrb[0].mxu0
        %392 = vmatprep.mubr.f32.mxu0 %v286
        %393 = vmatmul.mubr.f32.gmra.mrb[0].mxu0 %v285
        %v394 = vpop.f32.mrb[0].mxu0
        %v395 = vadd.f32 0.0, %v394
        %v396 = vpop.f32.mrb[0].mxu0
        %397 = vmatprep.mubr.f32.mxu0 %v288
        %398 = vmatmul.mubr.f32.gmra.mrb[0].mxu0 %v287
        %v399 = vpop.f32.mrb[0].mxu0
        %v400 = vadd.f32 0.0, %v399
        %v401 = vpop.f32.mrb[0].mxu0
        %402 = vmatprep.mubr.f32.mxu0 %v290
        %403 = vmatmul.mubr.f32.gmra.mrb[0].mxu0 %v289
        %v404 = vpop.f32.mrb[0].mxu0
        %v405 = vadd.f32 0.0, %v404
        %v406 = vpop.f32.mrb[0].mxu0
        %407 = vdwg.mxu0
        %v408 = vmul.f32 %v390, 0.0625
        %v409 = vmul.f32 %v395, 0.0625
        %v410 = vmul.f32 %v400, 0.0625
        %v411 = vmul.f32 %v405, 0.0625
        %v412 = vld [vmem:[%s4] sm:$0x3]
        %v413 = vld [vmem:[%s5] sm:$0xff]
        %v414 = vld [vmem:[%s5 + $0x8] sm:$0xff]
        %v415 = vld [vmem:[%s5 + $0x10] sm:$0xff]
        %v416 = vld [vmem:[%s5 + $0x18] sm:$0xff]
        %v417 = vld [vmem:[%s6] sm:$0xff]
        %v418 = vld [vmem:[%s6 + $0x8] sm:$0xff]
        %v419 = vld [vmem:[%s6 + $0x10] sm:$0xff]
        %v420 = vld [vmem:[%s6 + $0x18] sm:$0xff]
        %vm421 = vcmask 261120
        %v423 = vsel %vm421, %v412, 0
        %425 = vmatprep.subr.mxu0 0.0
        %426 = vmatpush1.msra.mxu0 %v408
        %427 = vmatprep.subr.mxu0 0.0
        %428 = vmatpush1.msra.mxu0 %v409
        %429 = vmatprep.subr.mxu0 0.0
        %430 = vmatpush1.msra.mxu0 %v410
        %431 = vmatprep.subr.mxu0 0.0
        %432 = vmatpush1.msra.mxu0 %v411
        %433 = vmatprep.subr.mxu0 0.0
        %434 = vmatpush1.msra.mxu0 0.0
        %435 = vmatprep.subr.mxu0 0.0
        %436 = vmatpush1.msra.mxu0 0.0
        %437 = vmatprep.subr.mxu0 0.0
        %438 = vmatpush1.msra.mxu0 0.0
        %439 = vmatprep.subr.mxu0 0.0
        %440 = vmatpush1.msra.mxu0 0.0
        %441 = vmatprep.subr.mxu0 0.0
        %442 = vmatpush1.msra.mxu0 0.0
        %443 = vmatprep.subr.mxu0 0.0
        %444 = vmatpush1.msra.mxu0 0.0
        %445 = vmatprep.subr.mxu0 0.0
        %446 = vmatpush1.msra.mxu0 0.0
        %447 = vmatprep.subr.mxu0 0.0
        %448 = vmatpush1.msra.mxu0 0.0
        %449 = vmatprep.subr.mxu0 0.0
        %450 = vmatpush1.msra.mxu0 0.0
        %451 = vmatprep.subr.mxu0 0.0
        %452 = vmatpush1.msra.mxu0 0.0
        %453 = vmatprep.subr.mxu0 0.0
        %454 = vmatpush1.msra.mxu0 0.0
        %455 = vmatprep.subr.mxu0 0.0
        %456 = vmatpush1.msra.mxu0 0.0
        %457 = vmatprep.subr.mxu0 0.0
        %458 = vmatpush1.msra.mxu0 0.0
        %459 = vmatprep.subr.mxu0 0.0
        %460 = vmatpush1.msra.mxu0 0.0
        %461 = vmatprep.subr.mxu0 0.0
        %462 = vmatpush1.msra.mxu0 0.0
        %463 = vmatprep.subr.mxu0 0.0
        %464 = vmatpush1.msra.mxu0 0.0
        %465 = vmatprep.subr.mxu0 0.0
        %466 = vmatpush1.msra.mxu0 0.0
        %467 = vmatprep.subr.mxu0 0.0
        %468 = vmatpush1.msra.mxu0 0.0
        %469 = vmatprep.subr.mxu0 0.0
        %470 = vmatpush1.msra.mxu0 0.0
        %471 = vmatprep.subr.mxu0 0.0
        %472 = vmatpush1.msra.mxu0 0.0
        %473 = vmatprep.subr.mxu0 0.0
        %474 = vmatpush1.msra.mxu0 0.0
        %475 = vmatprep.subr.mxu0 0.0
        %476 = vmatpush1.msra.mxu0 0.0
        %477 = vmatprep.subr.mxu0 0.0
        %478 = vmatpush1.msra.mxu0 0.0
        %479 = vmatprep.subr.mxu0 0.0
        %480 = vmatpush1.msra.mxu0 0.0
        %481 = vmatprep.subr.mxu0 0.0
        %482 = vmatpush1.msra.mxu0 0.0
        %483 = vmatprep.subr.mxu0 0.0
        %484 = vmatpush1.msra.mxu0 0.0
        %485 = vmatprep.subr.mxu0 0.0
        %486 = vmatpush1.msra.mxu0 0.0
        %487 = vmatprep.subr.mxu0 0.0
        %488 = vmatpush1.msra.mxu0 0.0
        %489 = vmatprep.mubr.f32.mxu0 0.0
        %490 = vmatmul.mubr.f32.gmra.mrb[0].mxu0 %v423
        %v491 = vpop.f32.mrb[0].mxu0
        %v492 = vadd.f32 0.0, %v491
        %v493 = vpop.f32.mrb[0].mxu0
        %494 = vdwg.mxu0
        %v495 = vmax.f32 %v492, 0.0
        %vm496 = vcmask 15360
        %v498 = vsel %vm496, %v413, 0
        %v501 = vsel %vm496, %v414, 0
        %v504 = vsel %vm496, %v415, 0
        %v507 = vsel %vm496, %v416, 0
        %vm509 = vcmask 1041408
        %v511 = vsel %vm509, %v495, 0
        %513 = vmatprep.subr.mxu0 0.0
        %514 = vmatpush1.msra.mxu0 %v511
        %515 = vmatprep.subr.mxu0 0.0
        %516 = vmatpush1.msra.mxu0 0.0
        %517 = vmatprep.subr.mxu0 0.0
        %518 = vmatpush1.msra.mxu0 0.0
        %519 = vmatprep.subr.mxu0 0.0
        %520 = vmatpush1.msra.mxu0 0.0
        %521 = vmatprep.subr.mxu0 0.0
        %522 = vmatpush1.msra.mxu0 0.0
        %523 = vmatprep.subr.mxu0 0.0
        %524 = vmatpush1.msra.mxu0 0.0
        %525 = vmatprep.subr.mxu0 0.0
        %526 = vmatpush1.msra.mxu0 0.0
        %527 = vmatprep.subr.mxu0 0.0
        %528 = vmatpush1.msra.mxu0 0.0
        %529 = vmatprep.subr.mxu0 0.0
        %530 = vmatpush1.msra.mxu0 0.0
        %531 = vmatprep.subr.mxu0 0.0
        %532 = vmatpush1.msra.mxu0 0.0
        %533 = vmatprep.subr.mxu0 0.0
        %534 = vmatpush1.msra.mxu0 0.0
        %535 = vmatprep.subr.mxu0 0.0
        %536 = vmatpush1.msra.mxu0 0.0
        %537 = vmatprep.subr.mxu0 0.0
        %538 = vmatpush1.msra.mxu0 0.0
        %539 = vmatprep.subr.mxu0 0.0
        %540 = vmatpush1.msra.mxu0 0.0
        %541 = vmatprep.subr.mxu0 0.0
        %542 = vmatpush1.msra.mxu0 0.0
        %543 = vmatprep.subr.mxu0 0.0
        %544 = vmatpush1.msra.mxu0 0.0
        %545 = vmatprep.subr.mxu0 0.0
        %546 = vmatpush1.msra.mxu0 0.0
        %547 = vmatprep.subr.mxu0 0.0
        %548 = vmatpush1.msra.mxu0 0.0
        %549 = vmatprep.subr.mxu0 0.0
        %550 = vmatpush1.msra.mxu0 0.0
        %551 = vmatprep.subr.mxu0 0.0
        %552 = vmatpush1.msra.mxu0 0.0
        %553 = vmatprep.subr.mxu0 0.0
        %554 = vmatpush1.msra.mxu0 0.0
        %555 = vmatprep.subr.mxu0 0.0
        %556 = vmatpush1.msra.mxu0 0.0
        %557 = vmatprep.subr.mxu0 0.0
        %558 = vmatpush1.msra.mxu0 0.0
        %559 = vmatprep.subr.mxu0 0.0
        %560 = vmatpush1.msra.mxu0 0.0
        %561 = vmatprep.subr.mxu0 0.0
        %562 = vmatpush1.msra.mxu0 0.0
        %563 = vmatprep.subr.mxu0 0.0
        %564 = vmatpush1.msra.mxu0 0.0
        %565 = vmatprep.subr.mxu0 0.0
        %566 = vmatpush1.msra.mxu0 0.0
        %567 = vmatprep.subr.mxu0 0.0
        %568 = vmatpush1.msra.mxu0 0.0
        %569 = vmatprep.subr.mxu0 0.0
        %570 = vmatpush1.msra.mxu0 0.0
        %571 = vmatprep.subr.mxu0 0.0
        %572 = vmatpush1.msra.mxu0 0.0
        %573 = vmatprep.subr.mxu0 0.0
        %574 = vmatpush1.msra.mxu0 0.0
        %575 = vmatprep.subr.mxu0 0.0
        %576 = vmatpush1.msra.mxu0 0.0
        %577 = vmatprep.mubr.f32.mxu0 0.0
        %578 = vmatmul.mubr.f32.gmra.mrb[0].mxu0 %v498
        %v579 = vpop.f32.mrb[0].mxu0
        %v580 = vadd.f32 0.0, %v579
        %v581 = vpop.f32.mrb[0].mxu0
        %582 = vmatprep.mubr.f32.mxu0 0.0
        %583 = vmatmul.mubr.f32.gmra.mrb[0].mxu0 %v501
        %v584 = vpop.f32.mrb[0].mxu0
        %v585 = vadd.f32 0.0, %v584
        %v586 = vpop.f32.mrb[0].mxu0
        %587 = vmatprep.mubr.f32.mxu0 0.0
        %588 = vmatmul.mubr.f32.gmra.mrb[0].mxu0 %v504
        %v589 = vpop.f32.mrb[0].mxu0
        %v590 = vadd.f32 0.0, %v589
        %v591 = vpop.f32.mrb[0].mxu0
        %592 = vmatprep.mubr.f32.mxu0 0.0
        %593 = vmatmul.mubr.f32.gmra.mrb[0].mxu0 %v507
        %v594 = vpop.f32.mrb[0].mxu0
        %v595 = vadd.f32 0.0, %v594
        %v596 = vpop.f32.mrb[0].mxu0
        %597 = vdwg.mxu0
        %v598 = vsub.f32 0.0, %v580
        %v599 = vsub.f32 0.0, %v585
        %v600 = vsub.f32 0.0, %v590
        %v601 = vsub.f32 0.0, %v595
        %v602 = vmul.f32 %v598, 1.442695
        %v603 = vpow.pop %v602
        %v604 = vmul.f32 %v599, 1.442695
        %v605 = vpow.pop %v604
        %v606 = vmul.f32 %v600, 1.442695
        %v607 = vpow.pop %v606
        %v608 = vmul.f32 %v601, 1.442695
        %v609 = vpow.pop %v608
        %v610 = vadd.f32 %v603, 1.0
        %v611 = vadd.f32 %v605, 1.0
        %v612 = vadd.f32 %v607, 1.0
        %v613 = vadd.f32 %v609, 1.0
        %v614 = vrcp.pop %v610
        %v615 = vmul.f32 1.0, %v614
        %v616 = vrcp.pop %v611
        %v617 = vmul.f32 1.0, %v616
        %v618 = vrcp.pop %v612
        %v619 = vmul.f32 1.0, %v618
        %v620 = vrcp.pop %v613
        %v621 = vmul.f32 1.0, %v620
        %622 = vrot.lane.b32.xlu0 %v495, 112
        %v623 = vpop.permute.xlu0 %622
        %v625 = vsel %vm496, %v417, 0
        %v628 = vsel %vm496, %v418, 0
        %v631 = vsel %vm496, %v419, 0
        %v634 = vsel %vm496, %v420, 0
        %v636 = vsel %vm509, %v623, 0
        %638 = vmatprep.subr.mxu0 0.0
        %639 = vmatpush1.msra.mxu0 %v636
        %640 = vmatprep.subr.mxu0 0.0
        %641 = vmatpush1.msra.mxu0 0.0
        %642 = vmatprep.subr.mxu0 0.0
        %643 = vmatpush1.msra.mxu0 0.0
        %644 = vmatprep.subr.mxu0 0.0
        %645 = vmatpush1.msra.mxu0 0.0
        %646 = vmatprep.subr.mxu0 0.0
        %647 = vmatpush1.msra.mxu0 0.0
        %648 = vmatprep.subr.mxu0 0.0
        %649 = vmatpush1.msra.mxu0 0.0
        %650 = vmatprep.subr.mxu0 0.0
        %651 = vmatpush1.msra.mxu0 0.0
        %652 = vmatprep.subr.mxu0 0.0
        %653 = vmatpush1.msra.mxu0 0.0
        %654 = vmatprep.subr.mxu0 0.0
        %655 = vmatpush1.msra.mxu0 0.0
        %656 = vmatprep.subr.mxu0 0.0
        %657 = vmatpush1.msra.mxu0 0.0
        %658 = vmatprep.subr.mxu0 0.0
        %659 = vmatpush1.msra.mxu0 0.0
        %660 = vmatprep.subr.mxu0 0.0
        %661 = vmatpush1.msra.mxu0 0.0
        %662 = vmatprep.subr.mxu0 0.0
        %663 = vmatpush1.msra.mxu0 0.0
        %664 = vmatprep.subr.mxu0 0.0
        %665 = vmatpush1.msra.mxu0 0.0
        %666 = vmatprep.subr.mxu0 0.0
        %667 = vmatpush1.msra.mxu0 0.0
        %668 = vmatprep.subr.mxu0 0.0
        %669 = vmatpush1.msra.mxu0 0.0
        %670 = vmatprep.subr.mxu0 0.0
        %671 = vmatpush1.msra.mxu0 0.0
        %672 = vmatprep.subr.mxu0 0.0
        %673 = vmatpush1.msra.mxu0 0.0
        %674 = vmatprep.subr.mxu0 0.0
        %675 = vmatpush1.msra.mxu0 0.0
        %676 = vmatprep.subr.mxu0 0.0
        %677 = vmatpush1.msra.mxu0 0.0
        %678 = vmatprep.subr.mxu0 0.0
        %679 = vmatpush1.msra.mxu0 0.0
        %680 = vmatprep.subr.mxu0 0.0
        %681 = vmatpush1.msra.mxu0 0.0
        %682 = vmatprep.subr.mxu0 0.0
        %683 = vmatpush1.msra.mxu0 0.0
        %684 = vmatprep.subr.mxu0 0.0
        %685 = vmatpush1.msra.mxu0 0.0
        %686 = vmatprep.subr.mxu0 0.0
        %687 = vmatpush1.msra.mxu0 0.0
        %688 = vmatprep.subr.mxu0 0.0
        %689 = vmatpush1.msra.mxu0 0.0
        %690 = vmatprep.subr.mxu0 0.0
        %691 = vmatpush1.msra.mxu0 0.0
        %692 = vmatprep.subr.mxu0 0.0
        %693 = vmatpush1.msra.mxu0 0.0
        %694 = vmatprep.subr.mxu0 0.0
        %695 = vmatpush1.msra.mxu0 0.0
        %696 = vmatprep.subr.mxu0 0.0
        %697 = vmatpush1.msra.mxu0 0.0
        %698 = vmatprep.subr.mxu0 0.0
        %699 = vmatpush1.msra.mxu0 0.0
        %700 = vmatprep.subr.mxu0 0.0
        %701 = vmatpush1.msra.mxu0 0.0
        %702 = vmatprep.mubr.f32.mxu0 0.0
        %703 = vmatmul.mubr.f32.gmra.mrb[0].mxu0 %v625
        %v704 = vpop.f32.mrb[0].mxu0
        %v705 = vadd.f32 0.0, %v704
        %v706 = vpop.f32.mrb[0].mxu0
        %707 = vmatprep.mubr.f32.mxu0 0.0
        %708 = vmatmul.mubr.f32.gmra.mrb[0].mxu0 %v628
        %v709 = vpop.f32.mrb[0].mxu0
        %v710 = vadd.f32 0.0, %v709
        %v711 = vpop.f32.mrb[0].mxu0
        %712 = vmatprep.mubr.f32.mxu0 0.0
        %713 = vmatmul.mubr.f32.gmra.mrb[0].mxu0 %v631
        %v714 = vpop.f32.mrb[0].mxu0
        %v715 = vadd.f32 0.0, %v714
        %v716 = vpop.f32.mrb[0].mxu0
        %717 = vmatprep.mubr.f32.mxu0 0.0
        %718 = vmatmul.mubr.f32.gmra.mrb[0].mxu0 %v634
        %v719 = vpop.f32.mrb[0].mxu0
        %v720 = vadd.f32 0.0, %v719
        %v721 = vpop.f32.mrb[0].mxu0
        %722 = vdwg.mxu0
        %v723 = vsub.f32 0.0, %v705
        %v724 = vsub.f32 0.0, %v710
        %v725 = vsub.f32 0.0, %v715
        %v726 = vsub.f32 0.0, %v720
        %v727 = vmul.f32 %v723, 1.442695
        %v728 = vpow.pop %v727
        %v729 = vmul.f32 %v724, 1.442695
        %v730 = vpow.pop %v729
        %v731 = vmul.f32 %v725, 1.442695
        %v732 = vpow.pop %v731
        %v733 = vmul.f32 %v726, 1.442695
        %v734 = vpow.pop %v733
        %v735 = vadd.f32 %v728, 1.0
        %v736 = vadd.f32 %v730, 1.0
        %v737 = vadd.f32 %v732, 1.0
        %v738 = vadd.f32 %v734, 1.0
        %v739 = vrcp.pop %v735
        %v740 = vmul.f32 1.0, %v739
        %v741 = vrcp.pop %v736
        %v742 = vmul.f32 1.0, %v741
        %v743 = vrcp.pop %v737
        %v744 = vmul.f32 1.0, %v743
        %v745 = vrcp.pop %v738
        %v746 = vmul.f32 1.0, %v745
        %v747 = vld [vmem:[%s2] sm:$0xff]
        %v748 = vld [vmem:[%s2 + $0x8] sm:$0xff]
        %v749 = vld [vmem:[%s2 + $0x10] sm:$0xff]
        %v750 = vld [vmem:[%s2 + $0x18] sm:$0xff]
        %vm751 = vcmask 130048
        %v753 = vsel %vm751, %v615, 0
        %v756 = vsel %vm751, %v617, 0
        %v759 = vsel %vm751, %v619, 0
        %v762 = vsel %vm751, %v621, 0
        %764 = vmatprep.subr.mxu0 %v748
        %765 = vmatpush1.msra.mxu0 %v747
        %766 = vmatprep.subr.mxu0 %v750
        %767 = vmatpush1.msra.mxu0 %v749
        %768 = vmatprep.subr.mxu0 0.0
        %769 = vmatpush1.msra.mxu0 0.0
        %770 = vmatprep.subr.mxu0 0.0
        %771 = vmatpush1.msra.mxu0 0.0
        %772 = vmatprep.subr.mxu0 0.0
        %773 = vmatpush1.msra.mxu0 0.0
        %774 = vmatprep.subr.mxu0 0.0
        %775 = vmatpush1.msra.mxu0 0.0
        %776 = vmatprep.subr.mxu0 0.0
        %777 = vmatpush1.msra.mxu0 0.0
        %778 = vmatprep.subr.mxu0 0.0
        %779 = vmatpush1.msra.mxu0 0.0
        %780 = vmatprep.subr.mxu0 0.0
        %781 = vmatpush1.msra.mxu0 0.0
        %782 = vmatprep.subr.mxu0 0.0
        %783 = vmatpush1.msra.mxu0 0.0
        %784 = vmatprep.subr.mxu0 0.0
        %785 = vmatpush1.msra.mxu0 0.0
        %786 = vmatprep.subr.mxu0 0.0
        %787 = vmatpush1.msra.mxu0 0.0
        %788 = vmatprep.subr.mxu0 0.0
        %789 = vmatpush1.msra.mxu0 0.0
        %790 = vmatprep.subr.mxu0 0.0
        %791 = vmatpush1.msra.mxu0 0.0
        %792 = vmatprep.subr.mxu0 0.0
        %793 = vmatpush1.msra.mxu0 0.0
        %794 = vmatprep.subr.mxu0 0.0
        %795 = vmatpush1.msra.mxu0 0.0
        %796 = vmatprep.subr.mxu0 0.0
        %797 = vmatpush1.msra.mxu0 0.0
        %798 = vmatprep.subr.mxu0 0.0
        %799 = vmatpush1.msra.mxu0 0.0
        %800 = vmatprep.subr.mxu0 0.0
        %801 = vmatpush1.msra.mxu0 0.0
        %802 = vmatprep.subr.mxu0 0.0
        %803 = vmatpush1.msra.mxu0 0.0
        %804 = vmatprep.subr.mxu0 0.0
        %805 = vmatpush1.msra.mxu0 0.0
        %806 = vmatprep.subr.mxu0 0.0
        %807 = vmatpush1.msra.mxu0 0.0
        %808 = vmatprep.subr.mxu0 0.0
        %809 = vmatpush1.msra.mxu0 0.0
        %810 = vmatprep.subr.mxu0 0.0
        %811 = vmatpush1.msra.mxu0 0.0
        %812 = vmatprep.subr.mxu0 0.0
        %813 = vmatpush1.msra.mxu0 0.0
        %814 = vmatprep.subr.mxu0 0.0
        %815 = vmatpush1.msra.mxu0 0.0
        %816 = vmatprep.subr.mxu0 0.0
        %817 = vmatpush1.msra.mxu0 0.0
        %818 = vmatprep.subr.mxu0 0.0
        %819 = vmatpush1.msra.mxu0 0.0
        %820 = vmatprep.subr.mxu0 0.0
        %821 = vmatpush1.msra.mxu0 0.0
        %822 = vmatprep.subr.mxu0 0.0
        %823 = vmatpush1.msra.mxu0 0.0
        %824 = vmatprep.subr.mxu0 0.0
        %825 = vmatpush1.msra.mxu0 0.0
        %826 = vmatprep.subr.mxu0 0.0
        %827 = vmatpush1.msra.mxu0 0.0
        %828 = vmatprep.mubr.f32.mxu0 0.0
        %829 = vmatmul.mubr.f32.gmra.mrb[0].mxu0 %v753
        %v830 = vpop.f32.mrb[0].mxu0
        %v831 = vadd.f32 0.0, %v830
        %v832 = vpop.f32.mrb[0].mxu0
        %v833 = vadd.f32 0.0, %v832
        %834 = vmatprep.mubr.f32.mxu0 0.0
        %835 = vmatmul.mubr.f32.gmra.mrb[0].mxu0 %v756
        %v836 = vpop.f32.mrb[0].mxu0
        %v837 = vadd.f32 0.0, %v836
        %v838 = vpop.f32.mrb[0].mxu0
        %v839 = vadd.f32 0.0, %v838
        %840 = vmatprep.mubr.f32.mxu0 0.0
        %841 = vmatmul.mubr.f32.gmra.mrb[0].mxu0 %v759
        %v842 = vpop.f32.mrb[0].mxu0
        %v843 = vadd.f32 0.0, %v842
        %v844 = vpop.f32.mrb[0].mxu0
        %v845 = vadd.f32 0.0, %v844
        %846 = vmatprep.mubr.f32.mxu0 0.0
        %847 = vmatmul.mubr.f32.gmra.mrb[0].mxu0 %v762
        %v848 = vpop.f32.mrb[0].mxu0
        %v849 = vadd.f32 0.0, %v848
        %v850 = vpop.f32.mrb[0].mxu0
        %v851 = vadd.f32 0.0, %v850
        %852 = vdwg.mxu0
        %v853 = vld [vmem:[%s3] sm:$0xff]
        %v854 = vld [vmem:[%s3 + $0x8] sm:$0xff]
        %v855 = vld [vmem:[%s3 + $0x10] sm:$0xff]
        %v856 = vld [vmem:[%s3 + $0x18] sm:$0xff]
        %v858 = vsel %vm751, %v740, 0
        %v861 = vsel %vm751, %v742, 0
        %v864 = vsel %vm751, %v744, 0
        %v867 = vsel %vm751, %v746, 0
        %869 = vmatprep.subr.mxu0 %v854
        %870 = vmatpush1.msra.mxu0 %v853
        %871 = vmatprep.subr.mxu0 %v856
        %872 = vmatpush1.msra.mxu0 %v855
        %873 = vmatprep.subr.mxu0 0.0
        %874 = vmatpush1.msra.mxu0 0.0
        %875 = vmatprep.subr.mxu0 0.0
        %876 = vmatpush1.msra.mxu0 0.0
        %877 = vmatprep.subr.mxu0 0.0
        %878 = vmatpush1.msra.mxu0 0.0
        %879 = vmatprep.subr.mxu0 0.0
        %880 = vmatpush1.msra.mxu0 0.0
        %881 = vmatprep.subr.mxu0 0.0
        %882 = vmatpush1.msra.mxu0 0.0
        %883 = vmatprep.subr.mxu0 0.0
        %884 = vmatpush1.msra.mxu0 0.0
        %885 = vmatprep.subr.mxu0 0.0
        %886 = vmatpush1.msra.mxu0 0.0
        %887 = vmatprep.subr.mxu0 0.0
        %888 = vmatpush1.msra.mxu0 0.0
        %889 = vmatprep.subr.mxu0 0.0
        %890 = vmatpush1.msra.mxu0 0.0
        %891 = vmatprep.subr.mxu0 0.0
        %892 = vmatpush1.msra.mxu0 0.0
        %893 = vmatprep.subr.mxu0 0.0
        %894 = vmatpush1.msra.mxu0 0.0
        %895 = vmatprep.subr.mxu0 0.0
        %896 = vmatpush1.msra.mxu0 0.0
        %897 = vmatprep.subr.mxu0 0.0
        %898 = vmatpush1.msra.mxu0 0.0
        %899 = vmatprep.subr.mxu0 0.0
        %900 = vmatpush1.msra.mxu0 0.0
        %901 = vmatprep.subr.mxu0 0.0
        %902 = vmatpush1.msra.mxu0 0.0
        %903 = vmatprep.subr.mxu0 0.0
        %904 = vmatpush1.msra.mxu0 0.0
        %905 = vmatprep.subr.mxu0 0.0
        %906 = vmatpush1.msra.mxu0 0.0
        %907 = vmatprep.subr.mxu0 0.0
        %908 = vmatpush1.msra.mxu0 0.0
        %909 = vmatprep.subr.mxu0 0.0
        %910 = vmatpush1.msra.mxu0 0.0
        %911 = vmatprep.subr.mxu0 0.0
        %912 = vmatpush1.msra.mxu0 0.0
        %913 = vmatprep.subr.mxu0 0.0
        %914 = vmatpush1.msra.mxu0 0.0
        %915 = vmatprep.subr.mxu0 0.0
        %916 = vmatpush1.msra.mxu0 0.0
        %917 = vmatprep.subr.mxu0 0.0
        %918 = vmatpush1.msra.mxu0 0.0
        %919 = vmatprep.subr.mxu0 0.0
        %920 = vmatpush1.msra.mxu0 0.0
        %921 = vmatprep.subr.mxu0 0.0
        %922 = vmatpush1.msra.mxu0 0.0
        %923 = vmatprep.subr.mxu0 0.0
        %924 = vmatpush1.msra.mxu0 0.0
        %925 = vmatprep.subr.mxu0 0.0
        %926 = vmatpush1.msra.mxu0 0.0
        %927 = vmatprep.subr.mxu0 0.0
        %928 = vmatpush1.msra.mxu0 0.0
        %929 = vmatprep.subr.mxu0 0.0
        %930 = vmatpush1.msra.mxu0 0.0
        %931 = vmatprep.subr.mxu0 0.0
        %932 = vmatpush1.msra.mxu0 0.0
        %933 = vmatprep.mubr.f32.mxu0 0.0
        %934 = vmatmul.mubr.f32.gmra.mrb[0].mxu0 %v858
        %v935 = vpop.f32.mrb[0].mxu0
        %v936 = vadd.f32 0.0, %v935
        %v937 = vpop.f32.mrb[0].mxu0
        %v938 = vadd.f32 0.0, %v937
        %939 = vmatprep.mubr.f32.mxu0 0.0
        %940 = vmatmul.mubr.f32.gmra.mrb[0].mxu0 %v861
        %v941 = vpop.f32.mrb[0].mxu0
        %v942 = vadd.f32 0.0, %v941
        %v943 = vpop.f32.mrb[0].mxu0
        %v944 = vadd.f32 0.0, %v943
        %945 = vmatprep.mubr.f32.mxu0 0.0
        %946 = vmatmul.mubr.f32.gmra.mrb[0].mxu0 %v864
        %v947 = vpop.f32.mrb[0].mxu0
        %v948 = vadd.f32 0.0, %v947
        %v949 = vpop.f32.mrb[0].mxu0
        %v950 = vadd.f32 0.0, %v949
        %951 = vmatprep.mubr.f32.mxu0 0.0
        %952 = vmatmul.mubr.f32.gmra.mrb[0].mxu0 %v867
        %v953 = vpop.f32.mrb[0].mxu0
        %v954 = vadd.f32 0.0, %v953
        %v955 = vpop.f32.mrb[0].mxu0
        %v956 = vadd.f32 0.0, %v955
        %957 = vdwg.mxu0
        %v958 = vmul.f32 %v831, %v936
        %v959 = vmul.f32 %v833, %v938
        %v960 = vmul.f32 %v837, %v942
        %v961 = vmul.f32 %v839, %v944
        %v962 = vmul.f32 %v843, %v948
        %v963 = vmul.f32 %v845, %v950
        %v964 = vmul.f32 %v849, %v954
        %v965 = vmul.f32 %v851, %v956
        %v966 = vmul.f32 %v283, %v958
        %v967 = vmul.f32 %v284, %v959
        %v968 = vmul.f32 %v285, %v960
        %v969 = vmul.f32 %v286, %v961
        %v970 = vmul.f32 %v287, %v962
        %v971 = vmul.f32 %v288, %v963
        %v972 = vmul.f32 %v289, %v964
        %v973 = vmul.f32 %v290, %v965
        %974 = vst [vmem:[%s274] sm:$0xff] %v966
        %975 = vst [vmem:[%s274 + $0x8] sm:$0xff] %v967
        %976 = vst [vmem:[%s274 + $0x10] sm:$0xff] %v968
        %977 = vst [vmem:[%s274 + $0x18] sm:$0xff] %v969
        %978 = vst [vmem:[%s274 + $0x20] sm:$0xff] %v970
        %979 = vst [vmem:[%s274 + $0x28] sm:$0xff] %v971
        %980 = vst [vmem:[%s274 + $0x30] sm:$0xff] %v972
        %981 = vst [vmem:[%s274 + $0x38] sm:$0xff] %v973
        %s982 = sand.u32 %s181, 1
        %s983 = scalar_lea.sflag [#allocation3], %s982
        %s984 = sand.u32 %s181, 1
        %s985 = smul.addr %s984, 64
        %s986 = scalar_lea.vmem [#allocation2], %s985
        // Predicated region
        $region49: #{tpu_custom_call.1} parent=47 // pred_check
          %p987 = pneg %p191
        $region50: #{tpu_custom_call.1} parent=47 // pred_check_branch
          %989 = sbr.rel (%p987) target = $region52
        $region51: #{tpu_custom_call.1} parent=47 // pred_region
          %s990 = smul.u32 4, %s21
          %s992 = ssub.s32 1024, 1024
          %993 = vsyncadd %s983, %s992
          %s994 = smul.addr %s990, 2
          %s995 = smul.addr %s994, 128
          %s996 = scalar_lea.hbm %s7, %s995
          %s997 = sshll.u32 %s986, 4
          %s998 = int_to_ptr.vmem [resolvable:$true] %s997
          %1003 = dma.vmem_to_hbm [thread:$0]  %s998, 1024, %s996, %s983, 256, 256, 16
        $region52: #{tpu_custom_call.1} parent=47 // pred_fallthru
          _
      $region48: #{tpu_custom_call.1} parent=5 // pred_fallthru
        _
      %p1004 = scmp.le.s32.totalorder 2, %s16
      // Predicated region
      $region53: #{tpu_custom_call.1} parent=5 // pred_check
        %p1005 = pneg %p1004
      $region54: #{tpu_custom_call.1} parent=5 // pred_check_branch
        %1007 = sbr.rel (%p1005) target = $region56
      $region55: #{tpu_custom_call.1} parent=5 // pred_region
        %s1008 = ssub.s32 %s16, 2
        // Predicated region
        $region57: #{tpu_custom_call.1} parent=55 // pred_check
          %p1009 = pneg %p197
        $region58: #{tpu_custom_call.1} parent=55 // pred_check_branch
          %1011 = sbr.rel (%p1009) target = $region60
        $region59: #{tpu_custom_call.1} parent=55 // pred_region
          %s1012 = sand.u32 %s182, 1
          %s1013 = scalar_lea.sflag [#allocation3], %s1012
          %s1014 = sand.u32 %s182, 1
          %s1015 = smul.addr %s1014, 64
          %s1016 = scalar_lea.vmem [#allocation2], %s1015
          %1017 = dma.done %s1013, 1024
        $region60: #{tpu_custom_call.1} parent=55 // pred_fallthru
          _
      $region56: #{tpu_custom_call.1} parent=5 // pred_fallthru
        _
    $region6: #{tpu_custom_call.1} parent=1 // loop_footer
      %s20 = sadd.s32 1, %s16
    $region7: #{tpu_custom_call.1} parent=1 // loop_footer_branch
      %15 = sbr.rel target = $region3
    $region8: #{tpu_custom_call.1} parent=1 // loop_exit
      _
    %1018 = vsyncpa [#allocation3], 1
    %s1019 = scalar_lea.sflag [#allocation3], 1
    %1020 = vsyncpa %s1019, 1

</llo_original>
